<compile_context>
chip_gen: v5e
topology: v5e:2x2
jax: 0.10.0
libtpu: 0.0.40
codegen_flags: <defaults>
</compile_context>

<pallas_src>
import math
from functools import partial

import jax
import jax.numpy as jnp
from jax.experimental import pallas as pl
from jax.experimental.pallas import tpu as pltpu


_VMEM_LIMIT = 48 * 1024 * 1024  # explicit scoped-VMEM cap (headroom on v7x's 64 MiB)


# ----------------------------------------------------------------------------
# Tile-size helper: largest aligned tile <= target that divides dim, else full.
# (A block equal to the full array dim is always legal.)
# ----------------------------------------------------------------------------

def _pick_tile(dim, target, align):
    if dim <= target:
        return dim
    t = (target // align) * align
    while t >= align:
        if dim % t == 0:
            return t
        t -= align
    return dim


# ----------------------------------------------------------------------------
# Kernel 1: fused LayerNorm -> matmul -> bias [-> QuickGELU]
#   grid = (M//tm, N//tn); full K per M-block so LN statistics are exact.
#   LN is computed once per M-tile (j == 0) into a bf16 VMEM scratch and reused
#   for every column tile j.
# ----------------------------------------------------------------------------

def _ln_linear_kernel(x_ref, g_ref, bta_ref, w_ref, bias_ref, o_ref, xn_ref,
                      *, eps, act):
    @pl.when(pl.program_id(1) == 0)
    def _():
        x = x_ref[...].astype(jnp.float32)                          # (tm, K)
        mean = jnp.mean(x, axis=-1, keepdims=True)
        var = jnp.mean(jnp.square(x - mean), axis=-1, keepdims=True)
        xn = (x - mean) * jax.lax.rsqrt(var + eps)
        xn = xn * g_ref[...].astype(jnp.float32) + bta_ref[...].astype(jnp.float32)
        xn_ref[...] = xn.astype(jnp.bfloat16)

    # bf16 MXU operands (weights already stored bf16), f32 accumulation.
    y = jnp.dot(xn_ref[...], w_ref[...],
                preferred_element_type=jnp.float32)                  # (tm, tn)
    y = y + bias_ref[...].astype(jnp.float32)
    if act == "quick_gelu":
        y = y * jax.nn.sigmoid(1.702 * y)
    o_ref[...] = y.astype(o_ref.dtype)


def ln_linear(x, gamma, beta, w, b, act=None, eps=1e-5, tm=512, tn=512,
              out_dtype=jnp.bfloat16):
    """x: (M, K) f32; gamma/beta: (K,) f32; w: (K, N) bf16 pre-transposed; b: (N,) f32."""
    M, K = x.shape
    Kw, N = w.shape
    assert Kw == K
    tm = _pick_tile(M, tm, 8)
    tn = _pick_tile(N, tn, 128)
    grid = (M // tm, N // tn)
    return pl.pallas_call(
        partial(_ln_linear_kernel, eps=eps, act=act),
        out_shape=jax.ShapeDtypeStruct((M, N), out_dtype),
        grid=grid,
        in_specs=[
            pl.BlockSpec((tm, K), lambda i, j: (i, 0)),
            pl.BlockSpec((1, K), lambda i, j: (0, 0)),
            pl.BlockSpec((1, K), lambda i, j: (0, 0)),
            pl.BlockSpec((K, tn), lambda i, j: (0, j)),
            pl.BlockSpec((1, tn), lambda i, j: (0, j)),
        ],
        out_specs=pl.BlockSpec((tm, tn), lambda i, j: (i, j)),
        scratch_shapes=[pltpu.VMEM((tm, K), jnp.bfloat16)],
        compiler_params=pltpu.CompilerParams(
            # j must be "arbitrary" so the LN scratch is always written (j==0)
            # before being read on the same core.
            dimension_semantics=("parallel", "arbitrary"),
            vmem_limit_bytes=_VMEM_LIMIT),
    )(x, gamma.reshape(1, K), beta.reshape(1, K), w, b.reshape(1, N))


# ----------------------------------------------------------------------------
# Kernel 2: tiled matmul with K accumulation, bias + residual fused epilogue.
#   grid = (M//tm, N//tn, K//tk); f32 accumulator scratch in VMEM.
# ----------------------------------------------------------------------------

def _linear_resid_kernel(x_ref, w_ref, b_ref, r_ref, o_ref, acc_ref):
    @pl.when(pl.program_id(2) == 0)
    def _():
        acc_ref[...] = jnp.zeros_like(acc_ref)

    acc_ref[...] += jnp.dot(x_ref[...].astype(jnp.bfloat16),   # x already bf16 -> no-op cast
                            w_ref[...],                        # bf16 weights in HBM
                            preferred_element_type=jnp.float32)

    @pl.when(pl.program_id(2) == pl.num_programs(2) - 1)
    def _():
        y = acc_ref[...] + b_ref[...].astype(jnp.float32)
        y = y + r_ref[...].astype(jnp.float32)
        o_ref[...] = y.astype(o_ref.dtype)


def linear_bias_residual(x, w, b, res, tm=512, tn=512, tk=512):
    """y = x @ w + b + res.  x: (M, K) bf16; w: (K, N) bf16; b: (N,) f32; res: (M, N) f32."""
    M, K = x.shape
    Kw, N = w.shape
    assert Kw == K
    tm = _pick_tile(M, tm, 8)
    tn = _pick_tile(N, tn, 128)
    tk = _pick_tile(K, tk, 128)
    grid = (M // tm, N // tn, K // tk)
    return pl.pallas_call(
        _linear_resid_kernel,
        out_shape=jax.ShapeDtypeStruct((M, N), res.dtype),
        grid=grid,
        in_specs=[
            pl.BlockSpec((tm, tk), lambda i, j, k: (i, k)),
            pl.BlockSpec((tk, tn), lambda i, j, k: (k, j)),
            pl.BlockSpec((1, tn), lambda i, j, k: (0, j)),
            pl.BlockSpec((tm, tn), lambda i, j, k: (i, j)),
        ],
        out_specs=pl.BlockSpec((tm, tn), lambda i, j, k: (i, j)),
        scratch_shapes=[pltpu.VMEM((tm, tn), jnp.float32)],
        compiler_params=pltpu.CompilerParams(
            dimension_semantics=("parallel", "parallel", "arbitrary"),
            vmem_limit_bytes=_VMEM_LIMIT),
    )(x, w, b.reshape(1, N), res)


# ----------------------------------------------------------------------------
# Kernel 3: multi-head attention core.
#   qkv3: (N, L, 3E) bf16 (free reshape of the qkv projection output).
#   grid = (N, L//tq): one batch element & query block per step.  Heads are
#   sliced along the LANE axis (no sublane gathers), softmax scale is already
#   folded into the q projection, and each head's output is stored directly
#   into its lane slice of the lane-dense (tq, E) output block.
# ----------------------------------------------------------------------------

def _attention_kernel(q_ref, kv_ref, o_ref, *, heads):
    E = o_ref.shape[-1]
    Dh = E // heads
    for h in range(heads):                                           # static unroll
        lo = h * Dh
        q = q_ref[0, :, lo:lo + Dh]                                  # (tq, Dh) bf16, pre-scaled
        k = kv_ref[0, :, E + lo:E + lo + Dh]                         # (L, Dh)  bf16
        v = kv_ref[0, :, 2 * E + lo:2 * E + lo + Dh]                 # (L, Dh)  bf16
        # q @ k^T without materializing a transpose (contract last dims).
        s = jax.lax.dot_general(q, k,
                                dimension_numbers=(((1,), (1,)), ((), ())),
                                preferred_element_type=jnp.float32)  # (tq, L)
        # TODO(synk): attn_mask is None in this instantiation; an additive mask
        #             would be added to `s` here before the softmax.
        s = s - jnp.max(s, axis=-1, keepdims=True)
        p = jnp.exp(s)
        inv = pl.reciprocal(jnp.sum(p, axis=-1, keepdims=True), approx=True)
        o = jnp.dot(p.astype(jnp.bfloat16), v,
                    preferred_element_type=jnp.float32)              # (tq, Dh)
        o_ref[0, :, lo:lo + Dh] = (o * inv).astype(o_ref.dtype)      # per-head lane-slice store


def attention_core(qkv3, heads, tq=256):
    N, L, threeE = qkv3.shape
    E = threeE // 3
    assert E % heads == 0
    tq = _pick_tile(L, tq, 8)
    # TODO(synk): for very long sequences, add KV-block online softmax so the
    #             full-L KV block and (tq, L) scores never sit in VMEM at once.
    return pl.pallas_call(
        partial(_attention_kernel, heads=heads),
        out_shape=jax.ShapeDtypeStruct((N, L, E), jnp.bfloat16),
        grid=(N, L // tq),
        in_specs=[
            pl.BlockSpec((1, tq, threeE), lambda n, qi: (n, qi, 0)),  # q rows
            pl.BlockSpec((1, L, threeE), lambda n, qi: (n, 0, 0)),    # full KV
        ],
        out_specs=pl.BlockSpec((1, tq, E), lambda n, qi: (n, qi, 0)),
        compiler_params=pltpu.CompilerParams(
            dimension_semantics=("parallel", "parallel"),
            vmem_limit_bytes=_VMEM_LIMIT),
    )(qkv3, qkv3)


# ----------------------------------------------------------------------------
# Residual attention block / Transformer (glue is only free reshapes)
# ----------------------------------------------------------------------------

def residual_attention_block(x2d, p, heads, N, L):
    """x2d: (N*L, E) f32 residual stream -> (N*L, E) f32."""
    E = x2d.shape[-1]

    # ---- attention branch: x + out_proj(MHA(ln_1(x))), all epilogues fused ----
    qkv = ln_linear(x2d, p["ln1_g"], p["ln1_b"],
                    p["in_proj_w"], p["in_proj_b"])                  # (N*L, 3E) bf16
    attn = attention_core(qkv.reshape(N, L, 3 * E), heads)           # (N, L, E) bf16
    x2d = linear_bias_residual(attn.reshape(N * L, E),
                               p["out_w"], p["out_b"], x2d)          # (N*L, E) f32

    # ---- MLP branch: x + c_proj(QuickGELU(c_fc(ln_2(x)))), epilogues fused ----
    hid = ln_linear(x2d, p["ln2_g"], p["ln2_b"],
                    p["fc_w"], p["fc_b"], act="quick_gelu")          # (N*L, 4E) bf16
    x2d = linear_bias_residual(hid, p["proj_w"], p["proj_b"], x2d)   # (N*L, E) f32
    return x2d


def transformer_forward(x, params, heads):
    """x: (L, N, E) like PyTorch's batch_first=False MultiheadAttention."""
    L, N, E = x.shape
    x = jnp.transpose(x, (1, 0, 2)).reshape(N * L, E)   # one transpose in; rest is free reshapes
    for p in params:
        x = residual_attention_block(x, p, heads, N, L)
    return jnp.transpose(x.reshape(N, L, E), (1, 0, 2))  # back to (L, N, E)


# ----------------------------------------------------------------------------
# Deterministic parameter construction.
#   * weights pre-transposed to (in_features, out_features) and stored bf16
#   * softmax scale 1/sqrt(Dh) folded into the q columns of in_proj_{w,b}
#   * biases / LN params kept f32 (tiny, added in the f32 epilogue)
# ----------------------------------------------------------------------------

def init_params(key, width, layers, heads):
    Dh = width // heads
    scale = 1.0 / math.sqrt(Dh)
    q_scale = jnp.concatenate([jnp.full((width,), scale, jnp.float32),
                               jnp.ones((2 * width,), jnp.float32)])
    params = []
    for layer in range(layers):
        keys = jax.random.split(jax.random.fold_in(key, layer), 6)
        std = 0.02
        in_proj_w = jax.random.normal(keys[0], (width, 3 * width), jnp.float32) * std
        in_proj_b = jnp.zeros((3 * width,), jnp.float32)
        p = {
            "in_proj_w": (in_proj_w * q_scale[None, :]).astype(jnp.bfloat16),
            "in_proj_b": in_proj_b * q_scale,
            "out_w":     (jax.random.normal(keys[1], (width, width), jnp.float32) * std
                          ).astype(jnp.bfloat16),
            "out_b":     jnp.zeros((width,), jnp.float32),
            "ln1_g":     jnp.ones((width,), jnp.float32),
            "ln1_b":     jnp.zeros((width,), jnp.float32),
            "fc_w":      (jax.random.normal(keys[2], (width, 4 * width), jnp.float32) * std
                          ).astype(jnp.bfloat16),
            "fc_b":      jax.random.normal(keys[3], (4 * width,), jnp.float32) * std,
            "proj_w":    (jax.random.normal(keys[4], (4 * width, width), jnp.float32) * std
                          ).astype(jnp.bfloat16),
            "proj_b":    jax.random.normal(keys[5], (width,), jnp.float32) * std,
            "ln2_g":     jnp.ones((width,), jnp.float32),
            "ln2_b":     jnp.zeros((width,), jnp.float32),
        }
        params.append(p)
    return params


if __name__ == "__main__":
    width, layers, heads = 32, 2, 4
    seq_len, batch = 8, 2

    key = jax.random.PRNGKey(0)
    x = jax.random.normal(jax.random.fold_in(key, 1234),
                          (seq_len, batch, width), jnp.float32)
    params = init_params(key, width, layers, heads)

    fwd = jax.jit(partial(transformer_forward, heads=heads))
    out = fwd(x, params)
    jax.block_until_ready(out)

    assert out.shape == (seq_len, batch, width)
    assert out.dtype == jnp.float32
    assert bool(jnp.all(jnp.isfinite(out)))
    print("KERNEL_OK")
</pallas_src>

<mosaic_0001>
module attributes {stable_mosaic.version = 11 : i64} {
  func.func @_linear_resid_kernel(%arg0: i32, %arg1: i32, %arg2: i32, %arg3: memref<16x32xbf16, #tpu.memory_space<vmem>>, %arg4: memref<32x32xbf16, #tpu.memory_space<vmem>>, %arg5: memref<1x32xf32, #tpu.memory_space<vmem>>, %arg6: memref<16x32xf32, #tpu.memory_space<vmem>>, %arg7: memref<16x32xf32, #tpu.memory_space<vmem>>, %arg8: memref<16x32xf32, #tpu.memory_space<vmem>>) attributes {dimension_semantics = [#tpu.dimension_semantics<parallel>, #tpu.dimension_semantics<parallel>, #tpu.dimension_semantics<arbitrary>], iteration_bounds = array<i64: 1, 1, 1>, scalar_prefetch = 0 : i64, scratch_operands = 1 : i64, tpu.core_type = #tpu.core_type<tc>, window_params = [{transform_indices = @transform_0, window_bounds = array<i64: 16, 32>}, {transform_indices = @transform_1, window_bounds = array<i64: 32, 32>}, {transform_indices = @transform_2, window_bounds = array<i64: 1, 32>}, {transform_indices = @transform_3, window_bounds = array<i64: 16, 32>}, {transform_indices = @transform_4, window_bounds = array<i64: 16, 32>}]} {
    %c0_i32 = arith.constant 0 : i32
    %0 = arith.cmpi eq, %arg2, %c0_i32 : i32
    %1 = arith.extui %0 : i1 to i32
    %c0_i32_0 = arith.constant 0 : i32
    %2 = arith.cmpi ne, %1, %c0_i32_0 : i32
    scf.if %2 {
      %cst_10 = arith.constant 0.000000e+00 : f32
      %12 = vector.broadcast %cst_10 : f32 to vector<16x32xf32>
      %c0_11 = arith.constant 0 : index
      %c0_12 = arith.constant 0 : index
      %13 = vector.load %arg8[%c0_11, %c0_12] : memref<16x32xf32, #tpu.memory_space<vmem>>, vector<16x32xf32>
      tpu.vector_store %arg8[%c0_11, %c0_12], %12 {strides = array<i32>} : memref<16x32xf32, #tpu.memory_space<vmem>>, vector<16x32xf32>,
    } else {
    }
    %c0 = arith.constant 0 : index
    %c0_1 = arith.constant 0 : index
    %3 = vector.load %arg8[%c0, %c0_1] : memref<16x32xf32, #tpu.memory_space<vmem>>, vector<16x32xf32>
    %c0_2 = arith.constant 0 : index
    %c0_3 = arith.constant 0 : index
    %4 = vector.load %arg3[%c0_2, %c0_3] : memref<16x32xbf16, #tpu.memory_space<vmem>>, vector<16x32xbf16>
    %c0_4 = arith.constant 0 : index
    %c0_5 = arith.constant 0 : index
    %5 = vector.load %arg4[%c0_4, %c0_5] : memref<32x32xbf16, #tpu.memory_space<vmem>>, vector<32x32xbf16>
    %cst = arith.constant dense<0.000000e+00> : vector<16x32xf32>
    %6 = tpu.matmul %4, %5, %cst {dimension_numbers = #tpu.dot_dimension_numbers<[1], [0], [0], [1], [0, 0, 1, 1], [], []>} : vector<16x32xbf16>, vector<32x32xbf16>, vector<16x32xf32> -> vector<16x32xf32>
    %7 = arith.addf %3, %6 : vector<16x32xf32>
    %c0_6 = arith.constant 0 : index
    %c0_7 = arith.constant 0 : index
    %8 = vector.load %arg8[%c0_6, %c0_7] : memref<16x32xf32, #tpu.memory_space<vmem>>, vector<16x32xf32>
    tpu.vector_store %arg8[%c0_6, %c0_7], %7 {strides = array<i32>} : memref<16x32xf32, #tpu.memory_space<vmem>>, vector<16x32xf32>,
    %c0_i32_8 = arith.constant 0 : i32
    %9 = arith.cmpi eq, %arg2, %c0_i32_8 : i32
    %10 = arith.extui %9 : i1 to i32
    %c0_i32_9 = arith.constant 0 : i32
    %11 = arith.cmpi ne, %10, %c0_i32_9 : i32
    scf.if %11 {
      %c0_10 = arith.constant 0 : index
      %c0_11 = arith.constant 0 : index
      %12 = vector.load %arg8[%c0_10, %c0_11] : memref<16x32xf32, #tpu.memory_space<vmem>>, vector<16x32xf32>
      %c0_12 = arith.constant 0 : index
      %c0_13 = arith.constant 0 : index
      %13 = vector.load %arg5[%c0_12, %c0_13] : memref<1x32xf32, #tpu.memory_space<vmem>>, vector<1x32xf32>
      %14 = vector.broadcast %13 : vector<1x32xf32> to vector<16x32xf32>
      %15 = arith.addf %12, %14 : vector<16x32xf32>
      %c0_14 = arith.constant 0 : index
      %c0_15 = arith.constant 0 : index
      %16 = vector.load %arg6[%c0_14, %c0_15] : memref<16x32xf32, #tpu.memory_space<vmem>>, vector<16x32xf32>
      %17 = arith.addf %15, %16 : vector<16x32xf32>
      %c0_16 = arith.constant 0 : index
      %c0_17 = arith.constant 0 : index
      %18 = vector.load %arg7[%c0_16, %c0_17] : memref<16x32xf32, #tpu.memory_space<vmem>>, vector<16x32xf32>
      tpu.vector_store %arg7[%c0_16, %c0_17], %17 {strides = array<i32>} : memref<16x32xf32, #tpu.memory_space<vmem>>, vector<16x32xf32>,
    } else {
    }
    return
  }
  func.func @transform_0(%arg0: i32, %arg1: i32, %arg2: i32) -> (i32, i32) {
    %c0_i32 = arith.constant 0 : i32
    return %arg0, %arg2 : i32, i32
  }
  func.func @transform_1(%arg0: i32, %arg1: i32, %arg2: i32) -> (i32, i32) {
    %c0_i32 = arith.constant 0 : i32
    return %arg2, %arg1 : i32, i32
  }
  func.func @transform_2(%arg0: i32, %arg1: i32, %arg2: i32) -> (i32, i32) {
    %c0_i32 = arith.constant 0 : i32
    %c0_i32_0 = arith.constant 0 : i32
    return %c0_i32, %arg1 : i32, i32
  }
  func.func @transform_3(%arg0: i32, %arg1: i32, %arg2: i32) -> (i32, i32) {
    %c0_i32 = arith.constant 0 : i32
    return %arg0, %arg1 : i32, i32
  }
  func.func @transform_4(%arg0: i32, %arg1: i32, %arg2: i32) -> (i32, i32) {
    %c0_i32 = arith.constant 0 : i32
    return %arg0, %arg1 : i32, i32
  }
}

module attributes {stable_mosaic.version = 11 : i64} {
  func.func @_ln_linear_kernel(%arg0: i32, %arg1: i32, %arg2: memref<16x32xf32, #tpu.memory_space<vmem>>, %arg3: memref<1x32xf32, #tpu.memory_space<vmem>>, %arg4: memref<1x32xf32, #tpu.memory_space<vmem>>, %arg5: memref<32x96xbf16, #tpu.memory_space<vmem>>, %arg6: memref<1x96xf32, #tpu.memory_space<vmem>>, %arg7: memref<16x96xbf16, #tpu.memory_space<vmem>>, %arg8: memref<16x32xbf16, #tpu.memory_space<vmem>>) attributes {dimension_semantics = [#tpu.dimension_semantics<parallel>, #tpu.dimension_semantics<arbitrary>], iteration_bounds = array<i64: 1, 1>, scalar_prefetch = 0 : i64, scratch_operands = 1 : i64, tpu.core_type = #tpu.core_type<tc>, window_params = [{transform_indices = @transform_0, window_bounds = array<i64: 16, 32>}, {pipeline_mode = #tpu.pipeline_mode<synchronous>, transform_indices = @transform_1, window_bounds = array<i64: 1, 32>}, {pipeline_mode = #tpu.pipeline_mode<synchronous>, transform_indices = @transform_2, window_bounds = array<i64: 1, 32>}, {transform_indices = @transform_3, window_bounds = array<i64: 32, 96>}, {transform_indices = @transform_4, window_bounds = array<i64: 1, 96>}, {transform_indices = @transform_5, window_bounds = array<i64: 16, 96>}]} {
    %c0_i32 = arith.constant 0 : i32
    %0 = arith.cmpi eq, %arg1, %c0_i32 : i32
    %1 = arith.extui %0 : i1 to i32
    %c0_i32_0 = arith.constant 0 : i32
    %2 = arith.cmpi ne, %1, %c0_i32_0 : i32
    scf.if %2 {
      %c0_8 = arith.constant 0 : index
      %c0_9 = arith.constant 0 : index
      %11 = vector.load %arg2[%c0_8, %c0_9] : memref<16x32xf32, #tpu.memory_space<vmem>>, vector<16x32xf32>
      %cst_10 = arith.constant dense<0.000000e+00> : vector<16xf32>
      %12 = vector.multi_reduction <add>, %11, %cst_10 [1] : vector<16x32xf32> to vector<16xf32>
      %13 = vector.shape_cast %12 : vector<16xf32> to vector<16x1xf32>
      %cst_11 = arith.constant 3.200000e+01 : f32
      %14 = vector.broadcast %cst_11 : f32 to vector<16x1xf32>
      %15 = arith.divf %13, %14 : vector<16x1xf32>
      %16 = vector.broadcast %15 : vector<16x1xf32> to vector<16x32xf32>
      %17 = arith.subf %11, %16 : vector<16x32xf32>
      %18 = arith.mulf %17, %17 : vector<16x32xf32>
      %cst_12 = arith.constant dense<0.000000e+00> : vector<16xf32>
      %19 = vector.multi_reduction <add>, %18, %cst_12 [1] : vector<16x32xf32> to vector<16xf32>
      %20 = vector.shape_cast %19 : vector<16xf32> to vector<16x1xf32>
      %cst_13 = arith.constant 3.200000e+01 : f32
      %21 = vector.broadcast %cst_13 : f32 to vector<16x1xf32>
      %22 = arith.divf %20, %21 : vector<16x1xf32>
      %23 = vector.broadcast %15 : vector<16x1xf32> to vector<16x32xf32>
      %24 = arith.subf %11, %23 : vector<16x32xf32>
      %cst_14 = arith.constant 9.99999974E-6 : f32
      %25 = vector.broadcast %cst_14 : f32 to vector<16x1xf32>
      %26 = arith.addf %22, %25 : vector<16x1xf32>
      %27 = math.rsqrt %26 : vector<16x1xf32>
      %28 = vector.broadcast %27 : vector<16x1xf32> to vector<16x32xf32>
      %29 = arith.mulf %24, %28 : vector<16x32xf32>
      %c0_15 = arith.constant 0 : index
      %c0_16 = arith.constant 0 : index
      %30 = vector.load %arg3[%c0_15, %c0_16] : memref<1x32xf32, #tpu.memory_space<vmem>>, vector<1x32xf32>
      %31 = vector.broadcast %30 : vector<1x32xf32> to vector<16x32xf32>
      %32 = arith.mulf %29, %31 : vector<16x32xf32>
      %c0_17 = arith.constant 0 : index
      %c0_18 = arith.constant 0 : index
      %33 = vector.load %arg4[%c0_17, %c0_18] : memref<1x32xf32, #tpu.memory_space<vmem>>, vector<1x32xf32>
      %34 = vector.broadcast %33 : vector<1x32xf32> to vector<16x32xf32>
      %35 = arith.addf %32, %34 : vector<16x32xf32>
      %36 = arith.truncf %35 : vector<16x32xf32> to vector<16x32xbf16>
      %c0_19 = arith.constant 0 : index
      %c0_20 = arith.constant 0 : index
      %37 = vector.load %arg8[%c0_19, %c0_20] : memref<16x32xbf16, #tpu.memory_space<vmem>>, vector<16x32xbf16>
      tpu.vector_store %arg8[%c0_19, %c0_20], %36 {strides = array<i32>} : memref<16x32xbf16, #tpu.memory_space<vmem>>, vector<16x32xbf16>,
    } else {
    }
    %c0 = arith.constant 0 : index
    %c0_1 = arith.constant 0 : index
    %3 = vector.load %arg8[%c0, %c0_1] : memref<16x32xbf16, #tpu.memory_space<vmem>>, vector<16x32xbf16>
    %c0_2 = arith.constant 0 : index
    %c0_3 = arith.constant 0 : index
    %4 = vector.load %arg5[%c0_2, %c0_3] : memref<32x96xbf16, #tpu.memory_space<vmem>>, vector<32x96xbf16>
    %cst = arith.constant dense<0.000000e+00> : vector<16x96xf32>
    %5 = tpu.matmul %3, %4, %cst {dimension_numbers = #tpu.dot_dimension_numbers<[1], [0], [0], [1], [0, 0, 1, 1], [], []>} : vector<16x32xbf16>, vector<32x96xbf16>, vector<16x96xf32> -> vector<16x96xf32>
    %c0_4 = arith.constant 0 : index
    %c0_5 = arith.constant 0 : index
    %6 = vector.load %arg6[%c0_4, %c0_5] : memref<1x96xf32, #tpu.memory_space<vmem>>, vector<1x96xf32>
    %7 = vector.broadcast %6 : vector<1x96xf32> to vector<16x96xf32>
    %8 = arith.addf %5, %7 : vector<16x96xf32>
    %9 = arith.truncf %8 : vector<16x96xf32> to vector<16x96xbf16>
    %c0_6 = arith.constant 0 : index
    %c0_7 = arith.constant 0 : index
    %10 = vector.load %arg7[%c0_6, %c0_7] : memref<16x96xbf16, #tpu.memory_space<vmem>>, vector<16x96xbf16>
    tpu.vector_store %arg7[%c0_6, %c0_7], %9 {strides = array<i32>} : memref<16x96xbf16, #tpu.memory_space<vmem>>, vector<16x96xbf16>,
    return
  }
  func.func @transform_0(%arg0: i32, %arg1: i32) -> (i32, i32) {
    %c0_i32 = arith.constant 0 : i32
    %c0_i32_0 = arith.constant 0 : i32
    return %arg0, %c0_i32 : i32, i32
  }
  func.func @transform_1(%arg0: i32, %arg1: i32) -> (i32, i32) {
    %c0_i32 = arith.constant 0 : i32
    %c0_i32_0 = arith.constant 0 : i32
    %c0_i32_1 = arith.constant 0 : i32
    return %c0_i32, %c0_i32_0 : i32, i32
  }
  func.func @transform_2(%arg0: i32, %arg1: i32) -> (i32, i32) {
    %c0_i32 = arith.constant 0 : i32
    %c0_i32_0 = arith.constant 0 : i32
    %c0_i32_1 = arith.constant 0 : i32
    return %c0_i32, %c0_i32_0 : i32, i32
  }
  func.func @transform_3(%arg0: i32, %arg1: i32) -> (i32, i32) {
    %c0_i32 = arith.constant 0 : i32
    %c0_i32_0 = arith.constant 0 : i32
    return %c0_i32, %arg1 : i32, i32
  }
  func.func @transform_4(%arg0: i32, %arg1: i32) -> (i32, i32) {
    %c0_i32 = arith.constant 0 : i32
    %c0_i32_0 = arith.constant 0 : i32
    return %c0_i32, %arg1 : i32, i32
  }
  func.func @transform_5(%arg0: i32, %arg1: i32) -> (i32, i32) {
    %c0_i32 = arith.constant 0 : i32
    return %arg0, %arg1 : i32, i32
  }
}

module attributes {stable_mosaic.version = 11 : i64} {
  func.func @_attention_kernel(%arg0: i32, %arg1: i32, %arg2: memref<1x8x96xbf16, #tpu.memory_space<vmem>>, %arg3: memref<1x8x96xbf16, #tpu.memory_space<vmem>>, %arg4: memref<1x8x32xbf16, #tpu.memory_space<vmem>>) attributes {dimension_semantics = [#tpu.dimension_semantics<parallel>, #tpu.dimension_semantics<parallel>], iteration_bounds = array<i64: 2, 1>, scalar_prefetch = 0 : i64, scratch_operands = 0 : i64, tpu.core_type = #tpu.core_type<tc>, window_params = [{transform_indices = @transform_0, window_bounds = array<i64: 1, 8, 96>}, {transform_indices = @transform_1, window_bounds = array<i64: 1, 8, 96>}, {transform_indices = @transform_2, window_bounds = array<i64: 1, 8, 32>}]} {
    %c0 = arith.constant 0 : index
    %c0_0 = arith.constant 0 : index
    %c0_1 = arith.constant 0 : index
    %0 = vector.load %arg2[%c0, %c0_0, %c0_1] : memref<1x8x96xbf16, #tpu.memory_space<vmem>>, vector<1x8x8xbf16>
    %1 = vector.shape_cast %0 : vector<1x8x8xbf16> to vector<8x8xbf16>
    %c0_2 = arith.constant 0 : index
    %c0_3 = arith.constant 0 : index
    %c32 = arith.constant 32 : index
    %2 = vector.load %arg3[%c0_2, %c0_3, %c32] : memref<1x8x96xbf16, #tpu.memory_space<vmem>>, vector<1x8x8xbf16>
    %3 = vector.shape_cast %2 : vector<1x8x8xbf16> to vector<8x8xbf16>
    %c0_4 = arith.constant 0 : index
    %c0_5 = arith.constant 0 : index
    %c64 = arith.constant 64 : index
    %4 = vector.load %arg3[%c0_4, %c0_5, %c64] : memref<1x8x96xbf16, #tpu.memory_space<vmem>>, vector<1x8x8xbf16>
    %5 = vector.shape_cast %4 : vector<1x8x8xbf16> to vector<8x8xbf16>
    %cst = arith.constant dense<0.000000e+00> : vector<8x8xf32>
    %6 = tpu.matmul %1, %3, %cst {dimension_numbers = #tpu.dot_dimension_numbers<[1], [1], [0], [0], [0, 0, 1, 0], [], []>} : vector<8x8xbf16>, vector<8x8xbf16>, vector<8x8xf32> -> vector<8x8xf32>
    %cst_6 = arith.constant dense<0xFF800000> : vector<8xf32>
    %7 = vector.multi_reduction <maximumf>, %6, %cst_6 [1] : vector<8x8xf32> to vector<8xf32>
    %8 = vector.shape_cast %7 : vector<8xf32> to vector<8x1xf32>
    %9 = vector.broadcast %8 : vector<8x1xf32> to vector<8x8xf32>
    %10 = arith.subf %6, %9 : vector<8x8xf32>
    %11 = math.exp %10 : vector<8x8xf32>
    %cst_7 = arith.constant dense<0.000000e+00> : vector<8xf32>
    %12 = vector.multi_reduction <add>, %11, %cst_7 [1] : vector<8x8xf32> to vector<8xf32>
    %13 = vector.shape_cast %12 : vector<8xf32> to vector<8x1xf32>
    %14 = tpu.reciprocal %13 {approx = true} : vector<8x1xf32> -> vector<8x1xf32>
    %15 = arith.truncf %11 : vector<8x8xf32> to vector<8x8xbf16>
    %cst_8 = arith.constant dense<0.000000e+00> : vector<8x8xf32>
    %16 = tpu.matmul %15, %5, %cst_8 {dimension_numbers = #tpu.dot_dimension_numbers<[1], [0], [0], [1], [0, 0, 1, 1], [], []>} : vector<8x8xbf16>, vector<8x8xbf16>, vector<8x8xf32> -> vector<8x8xf32>
    %17 = vector.broadcast %14 : vector<8x1xf32> to vector<8x8xf32>
    %18 = arith.mulf %16, %17 : vector<8x8xf32>
    %19 = arith.truncf %18 : vector<8x8xf32> to vector<8x8xbf16>
    %c0_9 = arith.constant 0 : index
    %c0_10 = arith.constant 0 : index
    %c0_11 = arith.constant 0 : index
    %20 = vector.load %arg4[%c0_9, %c0_10, %c0_11] : memref<1x8x32xbf16, #tpu.memory_space<vmem>>, vector<1x8x8xbf16>
    %21 = vector.shape_cast %20 : vector<1x8x8xbf16> to vector<8x8xbf16>
    %22 = vector.shape_cast %19 : vector<8x8xbf16> to vector<1x8x8xbf16>
    tpu.vector_store %arg4[%c0_9, %c0_10, %c0_11], %22 {strides = array<i32>} : memref<1x8x32xbf16, #tpu.memory_space<vmem>>, vector<1x8x8xbf16>,
    %c0_12 = arith.constant 0 : index
    %c0_13 = arith.constant 0 : index
    %c8 = arith.constant 8 : index
    %23 = vector.load %arg2[%c0_12, %c0_13, %c8] : memref<1x8x96xbf16, #tpu.memory_space<vmem>>, vector<1x8x8xbf16>
    %24 = vector.shape_cast %23 : vector<1x8x8xbf16> to vector<8x8xbf16>
    %c0_14 = arith.constant 0 : index
    %c0_15 = arith.constant 0 : index
    %c40 = arith.constant 40 : index
    %25 = vector.load %arg3[%c0_14, %c0_15, %c40] : memref<1x8x96xbf16, #tpu.memory_space<vmem>>, vector<1x8x8xbf16>
    %26 = vector.shape_cast %25 : vector<1x8x8xbf16> to vector<8x8xbf16>
    %c0_16 = arith.constant 0 : index
    %c0_17 = arith.constant 0 : index
    %c72 = arith.constant 72 : index
    %27 = vector.load %arg3[%c0_16, %c0_17, %c72] : memref<1x8x96xbf16, #tpu.memory_space<vmem>>, vector<1x8x8xbf16>
    %28 = vector.shape_cast %27 : vector<1x8x8xbf16> to vector<8x8xbf16>
    %cst_18 = arith.constant dense<0.000000e+00> : vector<8x8xf32>
    %29 = tpu.matmul %24, %26, %cst_18 {dimension_numbers = #tpu.dot_dimension_numbers<[1], [1], [0], [0], [0, 0, 1, 0], [], []>} : vector<8x8xbf16>, vector<8x8xbf16>, vector<8x8xf32> -> vector<8x8xf32>
    %cst_19 = arith.constant dense<0xFF800000> : vector<8xf32>
    %30 = vector.multi_reduction <maximumf>, %29, %cst_19 [1] : vector<8x8xf32> to vector<8xf32>
    %31 = vector.shape_cast %30 : vector<8xf32> to vector<8x1xf32>
    %32 = vector.broadcast %31 : vector<8x1xf32> to vector<8x8xf32>
    %33 = arith.subf %29, %32 : vector<8x8xf32>
    %34 = math.exp %33 : vector<8x8xf32>
    %cst_20 = arith.constant dense<0.000000e+00> : vector<8xf32>
    %35 = vector.multi_reduction <add>, %34, %cst_20 [1] : vector<8x8xf32> to vector<8xf32>
    %36 = vector.shape_cast %35 : vector<8xf32> to vector<8x1xf32>
    %37 = tpu.reciprocal %36 {approx = true} : vector<8x1xf32> -> vector<8x1xf32>
    %38 = arith.truncf %34 : vector<8x8xf32> to vector<8x8xbf16>
    %cst_21 = arith.constant dense<0.000000e+00> : vector<8x8xf32>
    %39 = tpu.matmul %38, %28, %cst_21 {dimension_numbers = #tpu.dot_dimension_numbers<[1], [0], [0], [1], [0, 0, 1, 1], [], []>} : vector<8x8xbf16>, vector<8x8xbf16>, vector<8x8xf32> -> vector<8x8xf32>
    %40 = vector.broadcast %37 : vector<8x1xf32> to vector<8x8xf32>
    %41 = arith.mulf %39, %40 : vector<8x8xf32>
    %42 = arith.truncf %41 : vector<8x8xf32> to vector<8x8xbf16>
    %c0_22 = arith.constant 0 : index
    %c0_23 = arith.constant 0 : index
    %c8_24 = arith.constant 8 : index
    %43 = vector.load %arg4[%c0_22, %c0_23, %c8_24] : memref<1x8x32xbf16, #tpu.memory_space<vmem>>, vector<1x8x8xbf16>
    %44 = vector.shape_cast %43 : vector<1x8x8xbf16> to vector<8x8xbf16>
    %45 = vector.shape_cast %42 : vector<8x8xbf16> to vector<1x8x8xbf16>
    tpu.vector_store %arg4[%c0_22, %c0_23, %c8_24], %45 {strides = array<i32>} : memref<1x8x32xbf16, #tpu.memory_space<vmem>>, vector<1x8x8xbf16>,
    %c0_25 = arith.constant 0 : index
    %c0_26 = arith.constant 0 : index
    %c16 = arith.constant 16 : index
    %46 = vector.load %arg2[%c0_25, %c0_26, %c16] : memref<1x8x96xbf16, #tpu.memory_space<vmem>>, vector<1x8x8xbf16>
    %47 = vector.shape_cast %46 : vector<1x8x8xbf16> to vector<8x8xbf16>
    %c0_27 = arith.constant 0 : index
    %c0_28 = arith.constant 0 : index
    %c48 = arith.constant 48 : index
    %48 = vector.load %arg3[%c0_27, %c0_28, %c48] : memref<1x8x96xbf16, #tpu.memory_space<vmem>>, vector<1x8x8xbf16>
    %49 = vector.shape_cast %48 : vector<1x8x8xbf16> to vector<8x8xbf16>
    %c0_29 = arith.constant 0 : index
    %c0_30 = arith.constant 0 : index
    %c80 = arith.constant 80 : index
    %50 = vector.load %arg3[%c0_29, %c0_30, %c80] : memref<1x8x96xbf16, #tpu.memory_space<vmem>>, vector<1x8x8xbf16>
    %51 = vector.shape_cast %50 : vector<1x8x8xbf16> to vector<8x8xbf16>
    %cst_31 = arith.constant dense<0.000000e+00> : vector<8x8xf32>
    %52 = tpu.matmul %47, %49, %cst_31 {dimension_numbers = #tpu.dot_dimension_numbers<[1], [1], [0], [0], [0, 0, 1, 0], [], []>} : vector<8x8xbf16>, vector<8x8xbf16>, vector<8x8xf32> -> vector<8x8xf32>
    %cst_32 = arith.constant dense<0xFF800000> : vector<8xf32>
    %53 = vector.multi_reduction <maximumf>, %52, %cst_32 [1] : vector<8x8xf32> to vector<8xf32>
    %54 = vector.shape_cast %53 : vector<8xf32> to vector<8x1xf32>
    %55 = vector.broadcast %54 : vector<8x1xf32> to vector<8x8xf32>
    %56 = arith.subf %52, %55 : vector<8x8xf32>
    %57 = math.exp %56 : vector<8x8xf32>
    %cst_33 = arith.constant dense<0.000000e+00> : vector<8xf32>
    %58 = vector.multi_reduction <add>, %57, %cst_33 [1] : vector<8x8xf32> to vector<8xf32>
    %59 = vector.shape_cast %58 : vector<8xf32> to vector<8x1xf32>
    %60 = tpu.reciprocal %59 {approx = true} : vector<8x1xf32> -> vector<8x1xf32>
    %61 = arith.truncf %57 : vector<8x8xf32> to vector<8x8xbf16>
    %cst_34 = arith.constant dense<0.000000e+00> : vector<8x8xf32>
    %62 = tpu.matmul %61, %51, %cst_34 {dimension_numbers = #tpu.dot_dimension_numbers<[1], [0], [0], [1], [0, 0, 1, 1], [], []>} : vector<8x8xbf16>, vector<8x8xbf16>, vector<8x8xf32> -> vector<8x8xf32>
    %63 = vector.broadcast %60 : vector<8x1xf32> to vector<8x8xf32>
    %64 = arith.mulf %62, %63 : vector<8x8xf32>
    %65 = arith.truncf %64 : vector<8x8xf32> to vector<8x8xbf16>
    %c0_35 = arith.constant 0 : index
    %c0_36 = arith.constant 0 : index
    %c16_37 = arith.constant 16 : index
    %66 = vector.load %arg4[%c0_35, %c0_36, %c16_37] : memref<1x8x32xbf16, #tpu.memory_space<vmem>>, vector<1x8x8xbf16>
    %67 = vector.shape_cast %66 : vector<1x8x8xbf16> to vector<8x8xbf16>
    %68 = vector.shape_cast %65 : vector<8x8xbf16> to vector<1x8x8xbf16>
    tpu.vector_store %arg4[%c0_35, %c0_36, %c16_37], %68 {strides = array<i32>} : memref<1x8x32xbf16, #tpu.memory_space<vmem>>, vector<1x8x8xbf16>,
    %c0_38 = arith.constant 0 : index
    %c0_39 = arith.constant 0 : index
    %c24 = arith.constant 24 : index
    %69 = vector.load %arg2[%c0_38, %c0_39, %c24] : memref<1x8x96xbf16, #tpu.memory_space<vmem>>, vector<1x8x8xbf16>
    %70 = vector.shape_cast %69 : vector<1x8x8xbf16> to vector<8x8xbf16>
    %c0_40 = arith.constant 0 : index
    %c0_41 = arith.constant 0 : index
    %c56 = arith.constant 56 : index
    %71 = vector.load %arg3[%c0_40, %c0_41, %c56] : memref<1x8x96xbf16, #tpu.memory_space<vmem>>, vector<1x8x8xbf16>
    %72 = vector.shape_cast %71 : vector<1x8x8xbf16> to vector<8x8xbf16>
    %c0_42 = arith.constant 0 : index
    %c0_43 = arith.constant 0 : index
    %c88 = arith.constant 88 : index
    %73 = vector.load %arg3[%c0_42, %c0_43, %c88] : memref<1x8x96xbf16, #tpu.memory_space<vmem>>, vector<1x8x8xbf16>
    %74 = vector.shape_cast %73 : vector<1x8x8xbf16> to vector<8x8xbf16>
    %cst_44 = arith.constant dense<0.000000e+00> : vector<8x8xf32>
    %75 = tpu.matmul %70, %72, %cst_44 {dimension_numbers = #tpu.dot_dimension_numbers<[1], [1], [0], [0], [0, 0, 1, 0], [], []>} : vector<8x8xbf16>, vector<8x8xbf16>, vector<8x8xf32> -> vector<8x8xf32>
    %cst_45 = arith.constant dense<0xFF800000> : vector<8xf32>
    %76 = vector.multi_reduction <maximumf>, %75, %cst_45 [1] : vector<8x8xf32> to vector<8xf32>
    %77 = vector.shape_cast %76 : vector<8xf32> to vector<8x1xf32>
    %78 = vector.broadcast %77 : vector<8x1xf32> to vector<8x8xf32>
    %79 = arith.subf %75, %78 : vector<8x8xf32>
    %80 = math.exp %79 : vector<8x8xf32>
    %cst_46 = arith.constant dense<0.000000e+00> : vector<8xf32>
    %81 = vector.multi_reduction <add>, %80, %cst_46 [1] : vector<8x8xf32> to vector<8xf32>
    %82 = vector.shape_cast %81 : vector<8xf32> to vector<8x1xf32>
    %83 = tpu.reciprocal %82 {approx = true} : vector<8x1xf32> -> vector<8x1xf32>
    %84 = arith.truncf %80 : vector<8x8xf32> to vector<8x8xbf16>
    %cst_47 = arith.constant dense<0.000000e+00> : vector<8x8xf32>
    %85 = tpu.matmul %84, %74, %cst_47 {dimension_numbers = #tpu.dot_dimension_numbers<[1], [0], [0], [1], [0, 0, 1, 1], [], []>} : vector<8x8xbf16>, vector<8x8xbf16>, vector<8x8xf32> -> vector<8x8xf32>
    %86 = vector.broadcast %83 : vector<8x1xf32> to vector<8x8xf32>
    %87 = arith.mulf %85, %86 : vector<8x8xf32>
    %88 = arith.truncf %87 : vector<8x8xf32> to vector<8x8xbf16>
    %c0_48 = arith.constant 0 : index
    %c0_49 = arith.constant 0 : index
    %c24_50 = arith.constant 24 : index
    %89 = vector.load %arg4[%c0_48, %c0_49, %c24_50] : memref<1x8x32xbf16, #tpu.memory_space<vmem>>, vector<1x8x8xbf16>
    %90 = vector.shape_cast %89 : vector<1x8x8xbf16> to vector<8x8xbf16>
    %91 = vector.shape_cast %88 : vector<8x8xbf16> to vector<1x8x8xbf16>
    tpu.vector_store %arg4[%c0_48, %c0_49, %c24_50], %91 {strides = array<i32>} : memref<1x8x32xbf16, #tpu.memory_space<vmem>>, vector<1x8x8xbf16>,
    return
  }
  func.func @transform_0(%arg0: i32, %arg1: i32) -> (i32, i32, i32) {
    %c0_i32 = arith.constant 0 : i32
    %c0_i32_0 = arith.constant 0 : i32
    return %arg0, %arg1, %c0_i32 : i32, i32, i32
  }
  func.func @transform_1(%arg0: i32, %arg1: i32) -> (i32, i32, i32) {
    %c0_i32 = arith.constant 0 : i32
    %c0_i32_0 = arith.constant 0 : i32
    %c0_i32_1 = arith.constant 0 : i32
    return %arg0, %c0_i32, %c0_i32_0 : i32, i32, i32
  }
  func.func @transform_2(%arg0: i32, %arg1: i32) -> (i32, i32, i32) {
    %c0_i32 = arith.constant 0 : i32
    %c0_i32_0 = arith.constant 0 : i32
    return %arg0, %arg1, %c0_i32 : i32, i32, i32
  }
}

module attributes {stable_mosaic.version = 11 : i64} {
  func.func @_ln_linear_kernel(%arg0: i32, %arg1: i32, %arg2: memref<16x32xf32, #tpu.memory_space<vmem>>, %arg3: memref<1x32xf32, #tpu.memory_space<vmem>>, %arg4: memref<1x32xf32, #tpu.memory_space<vmem>>, %arg5: memref<32x128xbf16, #tpu.memory_space<vmem>>, %arg6: memref<1x128xf32, #tpu.memory_space<vmem>>, %arg7: memref<16x128xbf16, #tpu.memory_space<vmem>>, %arg8: memref<16x32xbf16, #tpu.memory_space<vmem>>) attributes {dimension_semantics = [#tpu.dimension_semantics<parallel>, #tpu.dimension_semantics<arbitrary>], iteration_bounds = array<i64: 1, 1>, scalar_prefetch = 0 : i64, scratch_operands = 1 : i64, tpu.core_type = #tpu.core_type<tc>, window_params = [{transform_indices = @transform_0, window_bounds = array<i64: 16, 32>}, {pipeline_mode = #tpu.pipeline_mode<synchronous>, transform_indices = @transform_1, window_bounds = array<i64: 1, 32>}, {pipeline_mode = #tpu.pipeline_mode<synchronous>, transform_indices = @transform_2, window_bounds = array<i64: 1, 32>}, {transform_indices = @transform_3, window_bounds = array<i64: 32, 128>}, {transform_indices = @transform_4, window_bounds = array<i64: 1, 128>}, {transform_indices = @transform_5, window_bounds = array<i64: 16, 128>}]} {
    %c0_i32 = arith.constant 0 : i32
    %0 = arith.cmpi eq, %arg1, %c0_i32 : i32
    %1 = arith.extui %0 : i1 to i32
    %c0_i32_0 = arith.constant 0 : i32
    %2 = arith.cmpi ne, %1, %c0_i32_0 : i32
    scf.if %2 {
      %c0_10 = arith.constant 0 : index
      %c0_11 = arith.constant 0 : index
      %19 = vector.load %arg2[%c0_10, %c0_11] : memref<16x32xf32, #tpu.memory_space<vmem>>, vector<16x32xf32>
      %cst_12 = arith.constant dense<0.000000e+00> : vector<16xf32>
      %20 = vector.multi_reduction <add>, %19, %cst_12 [1] : vector<16x32xf32> to vector<16xf32>
      %21 = vector.shape_cast %20 : vector<16xf32> to vector<16x1xf32>
      %cst_13 = arith.constant 3.200000e+01 : f32
      %22 = vector.broadcast %cst_13 : f32 to vector<16x1xf32>
      %23 = arith.divf %21, %22 : vector<16x1xf32>
      %24 = vector.broadcast %23 : vector<16x1xf32> to vector<16x32xf32>
      %25 = arith.subf %19, %24 : vector<16x32xf32>
      %26 = arith.mulf %25, %25 : vector<16x32xf32>
      %cst_14 = arith.constant dense<0.000000e+00> : vector<16xf32>
      %27 = vector.multi_reduction <add>, %26, %cst_14 [1] : vector<16x32xf32> to vector<16xf32>
      %28 = vector.shape_cast %27 : vector<16xf32> to vector<16x1xf32>
      %cst_15 = arith.constant 3.200000e+01 : f32
      %29 = vector.broadcast %cst_15 : f32 to vector<16x1xf32>
      %30 = arith.divf %28, %29 : vector<16x1xf32>
      %31 = vector.broadcast %23 : vector<16x1xf32> to vector<16x32xf32>
      %32 = arith.subf %19, %31 : vector<16x32xf32>
      %cst_16 = arith.constant 9.99999974E-6 : f32
      %33 = vector.broadcast %cst_16 : f32 to vector<16x1xf32>
      %34 = arith.addf %30, %33 : vector<16x1xf32>
      %35 = math.rsqrt %34 : vector<16x1xf32>
      %36 = vector.broadcast %35 : vector<16x1xf32> to vector<16x32xf32>
      %37 = arith.mulf %32, %36 : vector<16x32xf32>
      %c0_17 = arith.constant 0 : index
      %c0_18 = arith.constant 0 : index
      %38 = vector.load %arg3[%c0_17, %c0_18] : memref<1x32xf32, #tpu.memory_space<vmem>>, vector<1x32xf32>
      %39 = vector.broadcast %38 : vector<1x32xf32> to vector<16x32xf32>
      %40 = arith.mulf %37, %39 : vector<16x32xf32>
      %c0_19 = arith.constant 0 : index
      %c0_20 = arith.constant 0 : index
      %41 = vector.load %arg4[%c0_19, %c0_20] : memref<1x32xf32, #tpu.memory_space<vmem>>, vector<1x32xf32>
      %42 = vector.broadcast %41 : vector<1x32xf32> to vector<16x32xf32>
      %43 = arith.addf %40, %42 : vector<16x32xf32>
      %44 = arith.truncf %43 : vector<16x32xf32> to vector<16x32xbf16>
      %c0_21 = arith.constant 0 : index
      %c0_22 = arith.constant 0 : index
      %45 = vector.load %arg8[%c0_21, %c0_22] : memref<16x32xbf16, #tpu.memory_space<vmem>>, vector<16x32xbf16>
      tpu.vector_store %arg8[%c0_21, %c0_22], %44 {strides = array<i32>} : memref<16x32xbf16, #tpu.memory_space<vmem>>, vector<16x32xbf16>,
    } else {
    }
    %c0 = arith.constant 0 : index
    %c0_1 = arith.constant 0 : index
    %3 = vector.load %arg8[%c0, %c0_1] : memref<16x32xbf16, #tpu.memory_space<vmem>>, vector<16x32xbf16>
    %c0_2 = arith.constant 0 : index
    %c0_3 = arith.constant 0 : index
    %4 = vector.load %arg5[%c0_2, %c0_3] : memref<32x128xbf16, #tpu.memory_space<vmem>>, vector<32x128xbf16>
    %cst = arith.constant dense<0.000000e+00> : vector<16x128xf32>
    %5 = tpu.matmul %3, %4, %cst {dimension_numbers = #tpu.dot_dimension_numbers<[1], [0], [0], [1], [0, 0, 1, 1], [], []>} : vector<16x32xbf16>, vector<32x128xbf16>, vector<16x128xf32> -> vector<16x128xf32>
    %c0_4 = arith.constant 0 : index
    %c0_5 = arith.constant 0 : index
    %6 = vector.load %arg6[%c0_4, %c0_5] : memref<1x128xf32, #tpu.memory_space<vmem>>, vector<1x128xf32>
    %7 = vector.broadcast %6 : vector<1x128xf32> to vector<16x128xf32>
    %8 = arith.addf %5, %7 : vector<16x128xf32>
    %cst_6 = arith.constant 1.702000e+00 : f32
    %9 = vector.broadcast %cst_6 : f32 to vector<16x128xf32>
    %10 = arith.mulf %9, %8 : vector<16x128xf32>
    %11 = arith.negf %10 : vector<16x128xf32>
    %12 = math.exp %11 : vector<16x128xf32>
    %cst_7 = arith.constant 1.000000e+00 : f32
    %13 = vector.broadcast %cst_7 : f32 to vector<16x128xf32>
    %14 = arith.addf %13, %12 : vector<16x128xf32>
    %15 = arith.divf %13, %14 : vector<16x128xf32>
    %16 = arith.mulf %8, %15 : vector<16x128xf32>
    %17 = arith.truncf %16 : vector<16x128xf32> to vector<16x128xbf16>
    %c0_8 = arith.constant 0 : index
    %c0_9 = arith.constant 0 : index
    %18 = vector.load %arg7[%c0_8, %c0_9] : memref<16x128xbf16, #tpu.memory_space<vmem>>, vector<16x128xbf16>
    tpu.vector_store %arg7[%c0_8, %c0_9], %17 {strides = array<i32>} : memref<16x128xbf16, #tpu.memory_space<vmem>>, vector<16x128xbf16>,
    return
  }
  func.func @transform_0(%arg0: i32, %arg1: i32) -> (i32, i32) {
    %c0_i32 = arith.constant 0 : i32
    %c0_i32_0 = arith.constant 0 : i32
    return %arg0, %c0_i32 : i32, i32
  }
  func.func @transform_1(%arg0: i32, %arg1: i32) -> (i32, i32) {
    %c0_i32 = arith.constant 0 : i32
    %c0_i32_0 = arith.constant 0 : i32
    %c0_i32_1 = arith.constant 0 : i32
    return %c0_i32, %c0_i32_0 : i32, i32
  }
  func.func @transform_2(%arg0: i32, %arg1: i32) -> (i32, i32) {
    %c0_i32 = arith.constant 0 : i32
    %c0_i32_0 = arith.constant 0 : i32
    %c0_i32_1 = arith.constant 0 : i32
    return %c0_i32, %c0_i32_0 : i32, i32
  }
  func.func @transform_3(%arg0: i32, %arg1: i32) -> (i32, i32) {
    %c0_i32 = arith.constant 0 : i32
    %c0_i32_0 = arith.constant 0 : i32
    return %c0_i32, %arg1 : i32, i32
  }
  func.func @transform_4(%arg0: i32, %arg1: i32) -> (i32, i32) {
    %c0_i32 = arith.constant 0 : i32
    %c0_i32_0 = arith.constant 0 : i32
    return %c0_i32, %arg1 : i32, i32
  }
  func.func @transform_5(%arg0: i32, %arg1: i32) -> (i32, i32) {
    %c0_i32 = arith.constant 0 : i32
    return %arg0, %arg1 : i32, i32
  }
}

module attributes {stable_mosaic.version = 11 : i64} {
  func.func @_ln_linear_kernel(%arg0: i32, %arg1: i32, %arg2: memref<16x32xf32, #tpu.memory_space<vmem>>, %arg3: memref<1x32xf32, #tpu.memory_space<vmem>>, %arg4: memref<1x32xf32, #tpu.memory_space<vmem>>, %arg5: memref<32x128xbf16, #tpu.memory_space<vmem>>, %arg6: memref<1x128xf32, #tpu.memory_space<vmem>>, %arg7: memref<16x128xbf16, #tpu.memory_space<vmem>>, %arg8: memref<16x32xbf16, #tpu.memory_space<vmem>>) attributes {dimension_semantics = [#tpu.dimension_semantics<parallel>, #tpu.dimension_semantics<arbitrary>], iteration_bounds = array<i64: 1, 1>, scalar_prefetch = 0 : i64, scratch_operands = 1 : i64, tpu.core_type = #tpu.core_type<tc>, window_params = [{transform_indices = @transform_0, window_bounds = array<i64: 16, 32>}, {pipeline_mode = #tpu.pipeline_mode<synchronous>, transform_indices = @transform_1, window_bounds = array<i64: 1, 32>}, {pipeline_mode = #tpu.pipeline_mode<synchronous>, transform_indices = @transform_2, window_bounds = array<i64: 1, 32>}, {transform_indices = @transform_3, window_bounds = array<i64: 32, 128>}, {transform_indices = @transform_4, window_bounds = array<i64: 1, 128>}, {transform_indices = @transform_5, window_bounds = array<i64: 16, 128>}]} {
    %c0_i32 = arith.constant 0 : i32
    %0 = arith.cmpi eq, %arg1, %c0_i32 : i32
    %1 = arith.extui %0 : i1 to i32
    %c0_i32_0 = arith.constant 0 : i32
    %2 = arith.cmpi ne, %1, %c0_i32_0 : i32
    scf.if %2 {
      %c0_10 = arith.constant 0 : index
      %c0_11 = arith.constant 0 : index
      %19 = vector.load %arg2[%c0_10, %c0_11] : memref<16x32xf32, #tpu.memory_space<vmem>>, vector<16x32xf32>
      %cst_12 = arith.constant dense<0.000000e+00> : vector<16xf32>
      %20 = vector.multi_reduction <add>, %19, %cst_12 [1] : vector<16x32xf32> to vector<16xf32>
      %21 = vector.shape_cast %20 : vector<16xf32> to vector<16x1xf32>
      %cst_13 = arith.constant 3.200000e+01 : f32
      %22 = vector.broadcast %cst_13 : f32 to vector<16x1xf32>
      %23 = arith.divf %21, %22 : vector<16x1xf32>
      %24 = vector.broadcast %23 : vector<16x1xf32> to vector<16x32xf32>
      %25 = arith.subf %19, %24 : vector<16x32xf32>
      %26 = arith.mulf %25, %25 : vector<16x32xf32>
      %cst_14 = arith.constant dense<0.000000e+00> : vector<16xf32>
      %27 = vector.multi_reduction <add>, %26, %cst_14 [1] : vector<16x32xf32> to vector<16xf32>
      %28 = vector.shape_cast %27 : vector<16xf32> to vector<16x1xf32>
      %cst_15 = arith.constant 3.200000e+01 : f32
      %29 = vector.broadcast %cst_15 : f32 to vector<16x1xf32>
      %30 = arith.divf %28, %29 : vector<16x1xf32>
      %31 = vector.broadcast %23 : vector<16x1xf32> to vector<16x32xf32>
      %32 = arith.subf %19, %31 : vector<16x32xf32>
      %cst_16 = arith.constant 9.99999974E-6 : f32
      %33 = vector.broadcast %cst_16 : f32 to vector<16x1xf32>
      %34 = arith.addf %30, %33 : vector<16x1xf32>
      %35 = math.rsqrt %34 : vector<16x1xf32>
      %36 = vector.broadcast %35 : vector<16x1xf32> to vector<16x32xf32>
      %37 = arith.mulf %32, %36 : vector<16x32xf32>
      %c0_17 = arith.constant 0 : index
      %c0_18 = arith.constant 0 : index
      %38 = vector.load %arg3[%c0_17, %c0_18] : memref<1x32xf32, #tpu.memory_space<vmem>>, vector<1x32xf32>
      %39 = vector.broadcast %38 : vector<1x32xf32> to vector<16x32xf32>
      %40 = arith.mulf %37, %39 : vector<16x32xf32>
      %c0_19 = arith.constant 0 : index
      %c0_20 = arith.constant 0 : index
      %41 = vector.load %arg4[%c0_19, %c0_20] : memref<1x32xf32, #tpu.memory_space<vmem>>, vector<1x32xf32>
      %42 = vector.broadcast %41 : vector<1x32xf32> to vector<16x32xf32>
      %43 = arith.addf %40, %42 : vector<16x32xf32>
      %44 = arith.truncf %43 : vector<16x32xf32> to vector<16x32xbf16>
      %c0_21 = arith.constant 0 : index
      %c0_22 = arith.constant 0 : index
      %45 = vector.load %arg8[%c0_21, %c0_22] : memref<16x32xbf16, #tpu.memory_space<vmem>>, vector<16x32xbf16>
      tpu.vector_store %arg8[%c0_21, %c0_22], %44 {strides = array<i32>} : memref<16x32xbf16, #tpu.memory_space<vmem>>, vector<16x32xbf16>,
    } else {
    }
    %c0 = arith.constant 0 : index
    %c0_1 = arith.constant 0 : index
    %3 = vector.load %arg8[%c0, %c0_1] : memref<16x32xbf16, #tpu.memory_space<vmem>>, vector<16x32xbf16>
    %c0_2 = arith.constant 0 : index
    %c0_3 = arith.constant 0 : index
    %4 = vector.load %arg5[%c0_2, %c0_3] : memref<32x128xbf16, #tpu.memory_space<vmem>>, vector<32x128xbf16>
    %cst = arith.constant dense<0.000000e+00> : vector<16x128xf32>
    %5 = tpu.matmul %3, %4, %cst {dimension_numbers = #tpu.dot_dimension_numbers<[1], [0], [0], [1], [0, 0, 1, 1], [], []>} : vector<16x32xbf16>, vector<32x128xbf16>, vector<16x128xf32> -> vector<16x128xf32>
    %c0_4 = arith.constant 0 : index
    %c0_5 = arith.constant 0 : index
    %6 = vector.load %arg6[%c0_4, %c0_5] : memref<1x128xf32, #tpu.memory_space<vmem>>, vector<1x128xf32>
    %7 = vector.broadcast %6 : vector<1x128xf32> to vector<16x128xf32>
    %8 = arith.addf %5, %7 : vector<16x128xf32>
    %cst_6 = arith.constant 1.702000e+00 : f32
    %9 = vector.broadcast %cst_6 : f32 to vector<16x128xf32>
    %10 = arith.mulf %9, %8 : vector<16x128xf32>
    %11 = arith.negf %10 : vector<16x128xf32>
    %12 = math.exp %11 : vector<16x128xf32>
    %cst_7 = arith.constant 1.000000e+00 : f32
    %13 = vector.broadcast %cst_7 : f32 to vector<16x128xf32>
    %14 = arith.addf %13, %12 : vector<16x128xf32>
    %15 = arith.divf %13, %14 : vector<16x128xf32>
    %16 = arith.mulf %8, %15 : vector<16x128xf32>
    %17 = arith.truncf %16 : vector<16x128xf32> to vector<16x128xbf16>
    %c0_8 = arith.constant 0 : index
    %c0_9 = arith.constant 0 : index
    %18 = vector.load %arg7[%c0_8, %c0_9] : memref<16x128xbf16, #tpu.memory_space<vmem>>, vector<16x128xbf16>
    tpu.vector_store %arg7[%c0_8, %c0_9], %17 {strides = array<i32>} : memref<16x128xbf16, #tpu.memory_space<vmem>>, vector<16x128xbf16>,
    return
  }
  func.func @transform_0(%arg0: i32, %arg1: i32) -> (i32, i32) {
    %c0_i32 = arith.constant 0 : i32
    %c0_i32_0 = arith.constant 0 : i32
    return %arg0, %c0_i32 : i32, i32
  }
  func.func @transform_1(%arg0: i32, %arg1: i32) -> (i32, i32) {
    %c0_i32 = arith.constant 0 : i32
    %c0_i32_0 = arith.constant 0 : i32
    %c0_i32_1 = arith.constant 0 : i32
    return %c0_i32, %c0_i32_0 : i32, i32
  }
  func.func @transform_2(%arg0: i32, %arg1: i32) -> (i32, i32) {
    %c0_i32 = arith.constant 0 : i32
    %c0_i32_0 = arith.constant 0 : i32
    %c0_i32_1 = arith.constant 0 : i32
    return %c0_i32, %c0_i32_0 : i32, i32
  }
  func.func @transform_3(%arg0: i32, %arg1: i32) -> (i32, i32) {
    %c0_i32 = arith.constant 0 : i32
    %c0_i32_0 = arith.constant 0 : i32
    return %c0_i32, %arg1 : i32, i32
  }
  func.func @transform_4(%arg0: i32, %arg1: i32) -> (i32, i32) {
    %c0_i32 = arith.constant 0 : i32
    %c0_i32_0 = arith.constant 0 : i32
    return %c0_i32, %arg1 : i32, i32
  }
  func.func @transform_5(%arg0: i32, %arg1: i32) -> (i32, i32) {
    %c0_i32 = arith.constant 0 : i32
    return %arg0, %arg1 : i32, i32
  }
}

module attributes {stable_mosaic.version = 11 : i64} {
  func.func @_linear_resid_kernel(%arg0: i32, %arg1: i32, %arg2: i32, %arg3: memref<16x32xbf16, #tpu.memory_space<vmem>>, %arg4: memref<32x32xbf16, #tpu.memory_space<vmem>>, %arg5: memref<1x32xf32, #tpu.memory_space<vmem>>, %arg6: memref<16x32xf32, #tpu.memory_space<vmem>>, %arg7: memref<16x32xf32, #tpu.memory_space<vmem>>, %arg8: memref<16x32xf32, #tpu.memory_space<vmem>>) attributes {dimension_semantics = [#tpu.dimension_semantics<parallel>, #tpu.dimension_semantics<parallel>, #tpu.dimension_semantics<arbitrary>], iteration_bounds = array<i64: 1, 1, 1>, scalar_prefetch = 0 : i64, scratch_operands = 1 : i64, tpu.core_type = #tpu.core_type<tc>, window_params = [{transform_indices = @transform_0, window_bounds = array<i64: 16, 32>}, {transform_indices = @transform_1, window_bounds = array<i64: 32, 32>}, {transform_indices = @transform_2, window_bounds = array<i64: 1, 32>}, {transform_indices = @transform_3, window_bounds = array<i64: 16, 32>}, {transform_indices = @transform_4, window_bounds = array<i64: 16, 32>}]} {
    %c0_i32 = arith.constant 0 : i32
    %0 = arith.cmpi eq, %arg2, %c0_i32 : i32
    %1 = arith.extui %0 : i1 to i32
    %c0_i32_0 = arith.constant 0 : i32
    %2 = arith.cmpi ne, %1, %c0_i32_0 : i32
    scf.if %2 {
      %cst_10 = arith.constant 0.000000e+00 : f32
      %12 = vector.broadcast %cst_10 : f32 to vector<16x32xf32>
      %c0_11 = arith.constant 0 : index
      %c0_12 = arith.constant 0 : index
      %13 = vector.load %arg8[%c0_11, %c0_12] : memref<16x32xf32, #tpu.memory_space<vmem>>, vector<16x32xf32>
      tpu.vector_store %arg8[%c0_11, %c0_12], %12 {strides = array<i32>} : memref<16x32xf32, #tpu.memory_space<vmem>>, vector<16x32xf32>,
    } else {
    }
    %c0 = arith.constant 0 : index
    %c0_1 = arith.constant 0 : index
    %3 = vector.load %arg8[%c0, %c0_1] : memref<16x32xf32, #tpu.memory_space<vmem>>, vector<16x32xf32>
    %c0_2 = arith.constant 0 : index
    %c0_3 = arith.constant 0 : index
    %4 = vector.load %arg3[%c0_2, %c0_3] : memref<16x32xbf16, #tpu.memory_space<vmem>>, vector<16x32xbf16>
    %c0_4 = arith.constant 0 : index
    %c0_5 = arith.constant 0 : index
    %5 = vector.load %arg4[%c0_4, %c0_5] : memref<32x32xbf16, #tpu.memory_space<vmem>>, vector<32x32xbf16>
    %cst = arith.constant dense<0.000000e+00> : vector<16x32xf32>
    %6 = tpu.matmul %4, %5, %cst {dimension_numbers = #tpu.dot_dimension_numbers<[1], [0], [0], [1], [0, 0, 1, 1], [], []>} : vector<16x32xbf16>, vector<32x32xbf16>, vector<16x32xf32> -> vector<16x32xf32>
    %7 = arith.addf %3, %6 : vector<16x32xf32>
    %c0_6 = arith.constant 0 : index
    %c0_7 = arith.constant 0 : index
    %8 = vector.load %arg8[%c0_6, %c0_7] : memref<16x32xf32, #tpu.memory_space<vmem>>, vector<16x32xf32>
    tpu.vector_store %arg8[%c0_6, %c0_7], %7 {strides = array<i32>} : memref<16x32xf32, #tpu.memory_space<vmem>>, vector<16x32xf32>,
    %c0_i32_8 = arith.constant 0 : i32
    %9 = arith.cmpi eq, %arg2, %c0_i32_8 : i32
    %10 = arith.extui %9 : i1 to i32
    %c0_i32_9 = arith.constant 0 : i32
    %11 = arith.cmpi ne, %10, %c0_i32_9 : i32
    scf.if %11 {
      %c0_10 = arith.constant 0 : index
      %c0_11 = arith.constant 0 : index
      %12 = vector.load %arg8[%c0_10, %c0_11] : memref<16x32xf32, #tpu.memory_space<vmem>>, vector<16x32xf32>
      %c0_12 = arith.constant 0 : index
      %c0_13 = arith.constant 0 : index
      %13 = vector.load %arg5[%c0_12, %c0_13] : memref<1x32xf32, #tpu.memory_space<vmem>>, vector<1x32xf32>
      %14 = vector.broadcast %13 : vector<1x32xf32> to vector<16x32xf32>
      %15 = arith.addf %12, %14 : vector<16x32xf32>
      %c0_14 = arith.constant 0 : index
      %c0_15 = arith.constant 0 : index
      %16 = vector.load %arg6[%c0_14, %c0_15] : memref<16x32xf32, #tpu.memory_space<vmem>>, vector<16x32xf32>
      %17 = arith.addf %15, %16 : vector<16x32xf32>
      %c0_16 = arith.constant 0 : index
      %c0_17 = arith.constant 0 : index
      %18 = vector.load %arg7[%c0_16, %c0_17] : memref<16x32xf32, #tpu.memory_space<vmem>>, vector<16x32xf32>
      tpu.vector_store %arg7[%c0_16, %c0_17], %17 {strides = array<i32>} : memref<16x32xf32, #tpu.memory_space<vmem>>, vector<16x32xf32>,
    } else {
    }
    return
  }
  func.func @transform_0(%arg0: i32, %arg1: i32, %arg2: i32) -> (i32, i32) {
    %c0_i32 = arith.constant 0 : i32
    return %arg0, %arg2 : i32, i32
  }
  func.func @transform_1(%arg0: i32, %arg1: i32, %arg2: i32) -> (i32, i32) {
    %c0_i32 = arith.constant 0 : i32
    return %arg2, %arg1 : i32, i32
  }
  func.func @transform_2(%arg0: i32, %arg1: i32, %arg2: i32) -> (i32, i32) {
    %c0_i32 = arith.constant 0 : i32
    %c0_i32_0 = arith.constant 0 : i32
    return %c0_i32, %arg1 : i32, i32
  }
  func.func @transform_3(%arg0: i32, %arg1: i32, %arg2: i32) -> (i32, i32) {
    %c0_i32 = arith.constant 0 : i32
    return %arg0, %arg1 : i32, i32
  }
  func.func @transform_4(%arg0: i32, %arg1: i32, %arg2: i32) -> (i32, i32) {
    %c0_i32 = arith.constant 0 : i32
    return %arg0, %arg1 : i32, i32
  }
}

module attributes {stable_mosaic.version = 11 : i64} {
  func.func @_linear_resid_kernel(%arg0: i32, %arg1: i32, %arg2: i32, %arg3: memref<16x128xbf16, #tpu.memory_space<vmem>>, %arg4: memref<128x32xbf16, #tpu.memory_space<vmem>>, %arg5: memref<1x32xf32, #tpu.memory_space<vmem>>, %arg6: memref<16x32xf32, #tpu.memory_space<vmem>>, %arg7: memref<16x32xf32, #tpu.memory_space<vmem>>, %arg8: memref<16x32xf32, #tpu.memory_space<vmem>>) attributes {dimension_semantics = [#tpu.dimension_semantics<parallel>, #tpu.dimension_semantics<parallel>, #tpu.dimension_semantics<arbitrary>], iteration_bounds = array<i64: 1, 1, 1>, scalar_prefetch = 0 : i64, scratch_operands = 1 : i64, tpu.core_type = #tpu.core_type<tc>, window_params = [{transform_indices = @transform_0, window_bounds = array<i64: 16, 128>}, {transform_indices = @transform_1, window_bounds = array<i64: 128, 32>}, {transform_indices = @transform_2, window_bounds = array<i64: 1, 32>}, {transform_indices = @transform_3, window_bounds = array<i64: 16, 32>}, {transform_indices = @transform_4, window_bounds = array<i64: 16, 32>}]} {
    %c0_i32 = arith.constant 0 : i32
    %0 = arith.cmpi eq, %arg2, %c0_i32 : i32
    %1 = arith.extui %0 : i1 to i32
    %c0_i32_0 = arith.constant 0 : i32
    %2 = arith.cmpi ne, %1, %c0_i32_0 : i32
    scf.if %2 {
      %cst_10 = arith.constant 0.000000e+00 : f32
      %12 = vector.broadcast %cst_10 : f32 to vector<16x32xf32>
      %c0_11 = arith.constant 0 : index
      %c0_12 = arith.constant 0 : index
      %13 = vector.load %arg8[%c0_11, %c0_12] : memref<16x32xf32, #tpu.memory_space<vmem>>, vector<16x32xf32>
      tpu.vector_store %arg8[%c0_11, %c0_12], %12 {strides = array<i32>} : memref<16x32xf32, #tpu.memory_space<vmem>>, vector<16x32xf32>,
    } else {
    }
    %c0 = arith.constant 0 : index
    %c0_1 = arith.constant 0 : index
    %3 = vector.load %arg8[%c0, %c0_1] : memref<16x32xf32, #tpu.memory_space<vmem>>, vector<16x32xf32>
    %c0_2 = arith.constant 0 : index
    %c0_3 = arith.constant 0 : index
    %4 = vector.load %arg3[%c0_2, %c0_3] : memref<16x128xbf16, #tpu.memory_space<vmem>>, vector<16x128xbf16>
    %c0_4 = arith.constant 0 : index
    %c0_5 = arith.constant 0 : index
    %5 = vector.load %arg4[%c0_4, %c0_5] : memref<128x32xbf16, #tpu.memory_space<vmem>>, vector<128x32xbf16>
    %cst = arith.constant dense<0.000000e+00> : vector<16x32xf32>
    %6 = tpu.matmul %4, %5, %cst {dimension_numbers = #tpu.dot_dimension_numbers<[1], [0], [0], [1], [0, 0, 1, 1], [], []>} : vector<16x128xbf16>, vector<128x32xbf16>, vector<16x32xf32> -> vector<16x32xf32>
    %7 = arith.addf %3, %6 : vector<16x32xf32>
    %c0_6 = arith.constant 0 : index
    %c0_7 = arith.constant 0 : index
    %8 = vector.load %arg8[%c0_6, %c0_7] : memref<16x32xf32, #tpu.memory_space<vmem>>, vector<16x32xf32>
    tpu.vector_store %arg8[%c0_6, %c0_7], %7 {strides = array<i32>} : memref<16x32xf32, #tpu.memory_space<vmem>>, vector<16x32xf32>,
    %c0_i32_8 = arith.constant 0 : i32
    %9 = arith.cmpi eq, %arg2, %c0_i32_8 : i32
    %10 = arith.extui %9 : i1 to i32
    %c0_i32_9 = arith.constant 0 : i32
    %11 = arith.cmpi ne, %10, %c0_i32_9 : i32
    scf.if %11 {
      %c0_10 = arith.constant 0 : index
      %c0_11 = arith.constant 0 : index
      %12 = vector.load %arg8[%c0_10, %c0_11] : memref<16x32xf32, #tpu.memory_space<vmem>>, vector<16x32xf32>
      %c0_12 = arith.constant 0 : index
      %c0_13 = arith.constant 0 : index
      %13 = vector.load %arg5[%c0_12, %c0_13] : memref<1x32xf32, #tpu.memory_space<vmem>>, vector<1x32xf32>
      %14 = vector.broadcast %13 : vector<1x32xf32> to vector<16x32xf32>
      %15 = arith.addf %12, %14 : vector<16x32xf32>
      %c0_14 = arith.constant 0 : index
      %c0_15 = arith.constant 0 : index
      %16 = vector.load %arg6[%c0_14, %c0_15] : memref<16x32xf32, #tpu.memory_space<vmem>>, vector<16x32xf32>
      %17 = arith.addf %15, %16 : vector<16x32xf32>
      %c0_16 = arith.constant 0 : index
      %c0_17 = arith.constant 0 : index
      %18 = vector.load %arg7[%c0_16, %c0_17] : memref<16x32xf32, #tpu.memory_space<vmem>>, vector<16x32xf32>
      tpu.vector_store %arg7[%c0_16, %c0_17], %17 {strides = array<i32>} : memref<16x32xf32, #tpu.memory_space<vmem>>, vector<16x32xf32>,
    } else {
    }
    return
  }
  func.func @transform_0(%arg0: i32, %arg1: i32, %arg2: i32) -> (i32, i32) {
    %c0_i32 = arith.constant 0 : i32
    return %arg0, %arg2 : i32, i32
  }
  func.func @transform_1(%arg0: i32, %arg1: i32, %arg2: i32) -> (i32, i32) {
    %c0_i32 = arith.constant 0 : i32
    return %arg2, %arg1 : i32, i32
  }
  func.func @transform_2(%arg0: i32, %arg1: i32, %arg2: i32) -> (i32, i32) {
    %c0_i32 = arith.constant 0 : i32
    %c0_i32_0 = arith.constant 0 : i32
    return %c0_i32, %arg1 : i32, i32
  }
  func.func @transform_3(%arg0: i32, %arg1: i32, %arg2: i32) -> (i32, i32) {
    %c0_i32 = arith.constant 0 : i32
    return %arg0, %arg1 : i32, i32
  }
  func.func @transform_4(%arg0: i32, %arg1: i32, %arg2: i32) -> (i32, i32) {
    %c0_i32 = arith.constant 0 : i32
    return %arg0, %arg1 : i32, i32
  }
}

</mosaic_0001>

<llo_original>
// kernel: transformer_forward.11
$region0: #{transformer_forward.11}
  #allocation0 [shape = 'u32[]', space=smem, size = 0x4, offset = 0x4, fixed_abs, tag = 'smem constant byte address 0x4 - core index']
  #allocation1 [shape = 'u32[72,128]{1,0:T(1,128)}', space=vmem, size = 0x9000, scoped, tag = 'internal scratch']
  %s0 = inlined_call_operand.vmem [shape: bf16[2,8,96], index: 0, kind: input, shape index: {}, may-alias: {0,1}]
  %s1 = inlined_call_operand.vmem [shape: bf16[2,8,96], index: 1, kind: input, shape index: {}, may-alias: {0,1}]
  %s2 = inlined_call_operand.vmem [shape: bf16[2,8,32], index: 2, kind: output, shape index: {}]
  %s3 = sld [smem:[#allocation0]]
  $region41: #{transformer_forward.11} parent=0
    _
  %s5 = ssub.s32 1, %s3
  %s6 = scalar_select 0, %s5, %s3
  loop: start=0, step=1, limit=4
  $region2: #{transformer_forward.11} parent=0 // loop_pre_header
    _
  $region3: #{transformer_forward.11} parent=0 // loop_header
    %s8 = sphi 0, %s12
    %p9 = scmp.ge.s32.totalorder %s8, 4
    %s15 = sphi 0, %s27
    %s16 = sphi 0, %s23
    %s17 = sphi 0, %s15
    %s18 = sphi 0, %s16
    %s19 = sphi 0, %s17
    %s20 = sphi 0, %s18
    %s32 = sphi 0, %s34
    %s35 = sphi 0, %s32
    %s36 = sphi 0, %s35
    %s52 = sphi 0, %s36
    %s58 = sphi 0, %s60
    %s61 = sphi 0, %s58
    %s62 = sphi 0, %s61
    %s78 = sphi 0, %s62
    %s86 = sphi 0, %s88
    %s89 = sphi 0, %s86
    %s90 = sphi 0, %s89
    %s106 = sphi 0, %s90
  $region4: #{transformer_forward.11} parent=0 // loop_header_branch
    %11 = sbr.rel (%p9) target = $region8
  $region5: #{transformer_forward.11} parent=0 // loop_body
    %s13 = ssub.s32 %s8, 1
    %s14 = ssub.s32 %s8, 2
    %s21 = sadd.s32 1, %s16
    %p22 = scmp.ge.s32.totalorder %s21, 1
    %s23 = scalar_select %p22, 0, %s21
    %s24 = sadd.s32 1, %s15
    %s25 = scalar_select %p22, %s24, %s15
    %p26 = scmp.ge.s32.totalorder %s25, 2
    %s27 = scalar_select %p26, 0, %s25
    %s28 = ssub.s32 %s15, %s27
    %s29 = ssub.s32 %s16, %s23
    %s30 = sor.u32 %s28, %s29
    %p31 = scmp.eq.s32.totalorder %s30, 0
    %s33 = sadd.s32 %s32, 1
    %s34 = scalar_select %p31, %s32, %s33
    %p37 = pneg %p31
    %p38 = scmp.eq.s32.totalorder %s8, 1
    %p39 = por %p37, %p38
    %p40 = scmp.ne.s32.totalorder %s32, %s35
    %p41 = scmp.eq.s32.totalorder %s8, 0
    %p42 = por %p40, %p41
    %p43 = scmp.ne.s32.totalorder %s32, %s35
    %p44 = scmp.eq.s32.totalorder %s13, 1
    %p45 = por %p43, %p44
    %p46 = scmp.ne.s32.totalorder %s35, %s36
    %p47 = scmp.eq.s32.totalorder %s13, 0
    %p48 = por %p46, %p47
    %p49 = scmp.ne.s32.totalorder %s35, %s36
    %p50 = scmp.eq.s32.totalorder %s14, 1
    %p51 = por %p49, %p50
    %p53 = scmp.ne.s32.totalorder %s36, %s52
    %p54 = scmp.eq.s32.totalorder %s14, 0
    %p55 = por %p53, %p54
    %s56 = ssub.s32 %s15, %s27
    %p57 = scmp.eq.s32.totalorder %s56, 0
    %s59 = sadd.s32 %s58, 1
    %s60 = scalar_select %p57, %s58, %s59
    %p63 = pneg %p57
    %p64 = scmp.eq.s32.totalorder %s8, 1
    %p65 = por %p63, %p64
    %p66 = scmp.ne.s32.totalorder %s58, %s61
    %p67 = scmp.eq.s32.totalorder %s8, 0
    %p68 = por %p66, %p67
    %p69 = scmp.ne.s32.totalorder %s58, %s61
    %p70 = scmp.eq.s32.totalorder %s13, 1
    %p71 = por %p69, %p70
    %p72 = scmp.ne.s32.totalorder %s61, %s62
    %p73 = scmp.eq.s32.totalorder %s13, 0
    %p74 = por %p72, %p73
    %p75 = scmp.ne.s32.totalorder %s61, %s62
    %p76 = scmp.eq.s32.totalorder %s14, 1
    %p77 = por %p75, %p76
    %p79 = scmp.ne.s32.totalorder %s62, %s78
    %p80 = scmp.eq.s32.totalorder %s14, 0
    %p81 = por %p79, %p80
    %s82 = ssub.s32 %s15, %s27
    %s83 = ssub.s32 %s16, %s23
    %s84 = sor.u32 %s82, %s83
    %p85 = scmp.eq.s32.totalorder %s84, 0
    %s87 = sadd.s32 %s86, 1
    %s88 = scalar_select %p85, %s86, %s87
    %p91 = pneg %p85
    %p92 = scmp.eq.s32.totalorder %s8, 1
    %p93 = por %p91, %p92
    %p94 = scmp.ne.s32.totalorder %s86, %s89
    %p95 = scmp.eq.s32.totalorder %s8, 0
    %p96 = por %p94, %p95
    %p97 = scmp.ne.s32.totalorder %s86, %s89
    %p98 = scmp.eq.s32.totalorder %s13, 1
    %p99 = por %p97, %p98
    %p100 = scmp.ne.s32.totalorder %s89, %s90
    %p101 = scmp.eq.s32.totalorder %s13, 0
    %p102 = por %p100, %p101
    %p103 = scmp.ne.s32.totalorder %s89, %s90
    %p104 = scmp.eq.s32.totalorder %s14, 1
    %p105 = por %p103, %p104
    %p107 = scmp.ne.s32.totalorder %s90, %s106
    %p108 = scmp.eq.s32.totalorder %s14, 0
    %p109 = por %p107, %p108
    %p110 = scmp.le.s32.totalorder 1, %s8
    %p111 = scmp.lt.s32.totalorder %s8, 3
    %p112 = pnand %p110, %p111
    %p113 = pneg %p112
    // Predicated region
    $region9: #{transformer_forward.11} parent=5 // pred_check
      _
    $region10: #{transformer_forward.11} parent=5 // pred_check_branch
      %115 = sbr.rel (%p112) target = $region12
    $region11: #{transformer_forward.11} parent=5 // pred_region
      %s116 = ssub.s32 %s8, 1
    $region12: #{transformer_forward.11} parent=5 // pred_fallthru
      _
    %p117 = scmp.lt.s32.totalorder %s8, 2
    // Predicated region
    $region13: #{transformer_forward.11} parent=5 // pred_check
      %p118 = pneg %p117
    $region14: #{transformer_forward.11} parent=5 // pred_check_branch
      %120 = sbr.rel (%p118) target = $region16
    $region15: #{transformer_forward.11} parent=5 // pred_region
      // Predicated region
      $region17: #{transformer_forward.11} parent=15 // pred_check
        %p121 = pneg %p42
      $region18: #{transformer_forward.11} parent=15 // pred_check_branch
        %123 = sbr.rel (%p121) target = $region20
      $region19: #{transformer_forward.11} parent=15 // pred_region
        %p124 = scmp.lt.s32.totalorder %s15, 1
        %s125 = scalar_select %p124, %s15, 1
        %p126 = scmp.lt.s32.totalorder %s16, 0
        %s127 = scalar_select %p126, %s16, 0
        %s128 = sadd.s32 %s127, %s125
        %s129 = smul.addr %s128, 4
        %s130 = scalar_lea.vmem %s0, %s129
      $region20: #{transformer_forward.11} parent=15 // pred_fallthru
        _
      // Predicated region
      $region21: #{transformer_forward.11} parent=15 // pred_check
        %p131 = pneg %p68
      $region22: #{transformer_forward.11} parent=15 // pred_check_branch
        %133 = sbr.rel (%p131) target = $region24
      $region23: #{transformer_forward.11} parent=15 // pred_region
        %p134 = scmp.lt.s32.totalorder %s15, 1
        %s135 = scalar_select %p134, %s15, 1
        %s136 = smul.addr %s135, 4
        %s137 = scalar_lea.vmem %s1, %s136
      $region24: #{transformer_forward.11} parent=15 // pred_fallthru
        _
    $region16: #{transformer_forward.11} parent=5 // pred_fallthru
      _
    %p138 = scmp.le.s32.totalorder 1, %s8
    %p139 = scmp.lt.s32.totalorder %s8, 3
    %p140 = pnand %p138, %p139
    %p141 = pneg %p140
    // Predicated region
    $region25: #{transformer_forward.11} parent=5 // pred_check
      _
    $region26: #{transformer_forward.11} parent=5 // pred_check_branch
      %143 = sbr.rel (%p140) target = $region28
    $region27: #{transformer_forward.11} parent=5 // pred_region
      %s144 = ssub.s32 %s8, 1
      %p145 = scmp.lt.s32.totalorder %s17, 1
      %s146 = scalar_select %p145, %s17, 1
      %p147 = scmp.lt.s32.totalorder %s18, 0
      %s148 = scalar_select %p147, %s18, 0
      %s149 = sadd.s32 %s148, %s146
      %s150 = smul.addr %s149, 4
      %s151 = scalar_lea.vmem %s0, %s150
      %p152 = pneg %p48
      %p153 = pneg %p45
      %p154 = scmp.lt.s32.totalorder %s17, 1
      %s155 = scalar_select %p154, %s17, 1
      %s156 = smul.addr %s155, 4
      %s157 = scalar_lea.vmem %s1, %s156
      %p158 = pneg %p74
      %p159 = pneg %p71
      %p160 = pneg %p102
      %p161 = pneg %p99
      %p162 = scmp.lt.s32.totalorder %s17, 1
      %s163 = scalar_select %p162, %s17, 1
      %p164 = scmp.lt.s32.totalorder %s18, 0
      %s165 = scalar_select %p164, %s18, 0
      %s166 = sadd.s32 %s165, %s163
      %s167 = smul.addr %s166, 4
      %s168 = scalar_lea.vmem %s2, %s167
      %p169 = scmp.lt.s32.totalorder %s17, 1
      %s170 = scalar_select %p169, %s17, 1
      %p171 = scmp.lt.s32.totalorder %s18, 0
      %s172 = scalar_select %p171, %s18, 0
      %s173 = sadd.s32 %s172, %s170
      %s174 = smul.addr %s173, 4
      %s175 = scalar_lea.vmem %s0, %s174
      %p176 = scmp.lt.s32.totalorder %s17, 1
      %s177 = scalar_select %p176, %s17, 1
      %s178 = smul.addr %s177, 4
      %s179 = scalar_lea.vmem %s1, %s178
      %p180 = scmp.lt.s32.totalorder %s17, 1
      %s181 = scalar_select %p180, %s17, 1
      %p182 = scmp.lt.s32.totalorder %s18, 0
      %s183 = scalar_select %p182, %s18, 0
      %s184 = sadd.s32 %s183, %s181
      %s185 = smul.addr %s184, 4
      %s186 = scalar_lea.vmem %s2, %s185
      %v188 = vld [vmem:[%s175] sm:$0xf]
      %v189 = vld [vmem:[%s179] sm:$0xf]
      %v191 = vunpack.c.l.b16 %v189
      %v192 = vpack.c.b16 %v191, %v191
      %193 = vrot.lane.b32.xlu0 %v192, 96
      %v194 = vpop.permute.xlu0 %193
      %vm195 = vcmask 64512
      %v197 = vsel %vm195, %v188, 0
      %v200 = vsel %vm195, %v194, 0
      %202 = vmatpush.bf16.xpose.msra.mxu0 0
      %203 = vmatpush.bf16.xpose.msra.mxu0 0
      %204 = vmatpush.bf16.xpose.msra.mxu0 0
      %205 = vmatpush.bf16.xpose.msra.mxu0 0
      %206 = vmatpush.bf16.xpose.msra.mxu0 0
      %207 = vmatpush.bf16.xpose.msra.mxu0 0
      %208 = vmatpush.bf16.xpose.msra.mxu0 0
      %209 = vmatpush.bf16.xpose.msra.mxu0 %v200
      %210 = vmatmul.bf16.gmra.mxu0 %v197
      %v211 = vpop.f32.mrf.mxu0
      %v212 = vadd.f32 0.0, %v211
      %v213 = vpop.f32.mrf.mxu0
      %214 = vdwg.mxu0
      %v215 = vsel %vm195, %v212, -inf
      %216 = vmax.xlane.f32.xlu0 %v215
      %v217 = vpop.xlane.xlu0 %216
      %v218 = vsub.f32 %v212, %v217
      %v219 = vmul.f32 %v218, 1.442695
      %v220 = vpow.pop %v219
      %v221 = vsel %vm195, %v220, 0.0
      %222 = vadd.xlane.f32.xlu0 %v221
      %v223 = vpop.xlane.xlu0 %222
      %v224 = vrcp.pop %v223
      %v225 = vpack.c.bf16 %v220, %v220
      %226 = vrot.lane.b32.xlu0 %v192, 64
      %v227 = vpop.permute.xlu0 %226
      %v229 = vsel %vm195, %v225, 0
      %vm231 = vcmask 1043456
      %v233 = vsel %vm231, %v227, 0
      %235 = vmatpush.bf16.msra.mxu0 0
      %236 = vmatpush.bf16.msra.mxu0 0
      %237 = vmatpush.bf16.msra.mxu0 0
      %238 = vmatpush.bf16.msra.mxu0 0
      %239 = vmatpush.bf16.msra.mxu0 0
      %240 = vmatpush.bf16.msra.mxu0 0
      %241 = vmatpush.bf16.msra.mxu0 0
      %242 = vmatpush.bf16.msra.mxu0 %v233
      %243 = vmatmul.bf16.gmra.mxu0 %v229
      %v244 = vpop.f32.mrf.mxu0
      %v245 = vadd.f32 0.0, %v244
      %v246 = vpop.f32.mrf.mxu0
      %247 = vdwg.mxu0
      %v248 = vmul.f32 %v245, %v224
      %v249 = vpack.c.bf16 %v248, %v248
      %vm250 = vcmask 60416
      %251 = vst.msk [vmem:[%s186] sm:$0xf] %vm250, %v249
      %v252 = vld [vmem:[%s175] sm:$0xf]
      %v253 = vld [vmem:[%s179] sm:$0xf]
      %v255 = vunpack.c.l.b16 %v252
      %v256 = vpack.c.b16 %v255, %v255
      %257 = vrot.lane.b32.xlu0 %v256, 120
      %v258 = vpop.permute.xlu0 %257
      %v260 = vunpack.c.l.b16 %v253
      %v261 = vpack.c.b16 %v260, %v260
      %262 = vrot.lane.b32.xlu0 %v261, 88
      %v263 = vpop.permute.xlu0 %262
      %v265 = vsel %vm195, %v258, 0
      %v268 = vsel %vm195, %v263, 0
      %270 = vmatpush.bf16.xpose.msra.mxu0 0
      %271 = vmatpush.bf16.xpose.msra.mxu0 0
      %272 = vmatpush.bf16.xpose.msra.mxu0 0
      %273 = vmatpush.bf16.xpose.msra.mxu0 0
      %274 = vmatpush.bf16.xpose.msra.mxu0 0
      %275 = vmatpush.bf16.xpose.msra.mxu0 0
      %276 = vmatpush.bf16.xpose.msra.mxu0 0
      %277 = vmatpush.bf16.xpose.msra.mxu0 %v268
      %278 = vmatmul.bf16.gmra.mxu0 %v265
      %v279 = vpop.f32.mrf.mxu0
      %v280 = vadd.f32 0.0, %v279
      %v281 = vpop.f32.mrf.mxu0
      %282 = vdwg.mxu0
      %v283 = vsel %vm195, %v280, -inf
      %284 = vmax.xlane.f32.xlu0 %v283
      %v285 = vpop.xlane.xlu0 %284
      %v286 = vsub.f32 %v280, %v285
      %v287 = vmul.f32 %v286, 1.442695
      %v288 = vpow.pop %v287
      %v289 = vsel %vm195, %v288, 0.0
      %290 = vadd.xlane.f32.xlu0 %v289
      %v291 = vpop.xlane.xlu0 %290
      %v292 = vrcp.pop %v291
      %v293 = vpack.c.bf16 %v288, %v288
      %294 = vrot.lane.b32.xlu0 %v261, 56
      %v295 = vpop.permute.xlu0 %294
      %v297 = vsel %vm195, %v293, 0
      %v300 = vsel %vm231, %v295, 0
      %302 = vmatpush.bf16.msra.mxu0 0
      %303 = vmatpush.bf16.msra.mxu0 0
      %304 = vmatpush.bf16.msra.mxu0 0
      %305 = vmatpush.bf16.msra.mxu0 0
      %306 = vmatpush.bf16.msra.mxu0 0
      %307 = vmatpush.bf16.msra.mxu0 0
      %308 = vmatpush.bf16.msra.mxu0 0
      %309 = vmatpush.bf16.msra.mxu0 %v300
      %310 = vmatmul.bf16.gmra.mxu0 %v297
      %v311 = vpop.f32.mrf.mxu0
      %v312 = vadd.f32 0.0, %v311
      %v313 = vpop.f32.mrf.mxu0
      %314 = vdwg.mxu0
      %v315 = vmul.f32 %v312, %v292
      %v316 = vpack.c.bf16 %v315, %v315
      %318 = vrot.lane.b32.xlu0 %v316, 8
      %v319 = vpop.permute.xlu0 %318
      %vm321 = vcmask 126016
      %322 = vst.msk [vmem:[%s186] sm:$0xf] %vm321, %v319
      %v323 = vld [vmem:[%s175] sm:$0xf]
      %v324 = vld [vmem:[%s179] sm:$0xf]
      %v326 = vunpack.c.l.b16 %v323
      %v327 = vpack.c.b16 %v326, %v326
      %328 = vrot.lane.b32.xlu0 %v327, 112
      %v329 = vpop.permute.xlu0 %328
      %v331 = vunpack.c.l.b16 %v324
      %v332 = vpack.c.b16 %v331, %v331
      %333 = vrot.lane.b32.xlu0 %v332, 80
      %v334 = vpop.permute.xlu0 %333
      %v336 = vsel %vm195, %v329, 0
      %v339 = vsel %vm195, %v334, 0
      %341 = vmatpush.bf16.xpose.msra.mxu0 0
      %342 = vmatpush.bf16.xpose.msra.mxu0 0
      %343 = vmatpush.bf16.xpose.msra.mxu0 0
      %344 = vmatpush.bf16.xpose.msra.mxu0 0
      %345 = vmatpush.bf16.xpose.msra.mxu0 0
      %346 = vmatpush.bf16.xpose.msra.mxu0 0
      %347 = vmatpush.bf16.xpose.msra.mxu0 0
      %348 = vmatpush.bf16.xpose.msra.mxu0 %v339
      %349 = vmatmul.bf16.gmra.mxu0 %v336
      %v350 = vpop.f32.mrf.mxu0
      %v351 = vadd.f32 0.0, %v350
      %v352 = vpop.f32.mrf.mxu0
      %353 = vdwg.mxu0
      %v354 = vsel %vm195, %v351, -inf
      %355 = vmax.xlane.f32.xlu0 %v354
      %v356 = vpop.xlane.xlu0 %355
      %v357 = vsub.f32 %v351, %v356
      %v358 = vmul.f32 %v357, 1.442695
      %v359 = vpow.pop %v358
      %v360 = vsel %vm195, %v359, 0.0
      %361 = vadd.xlane.f32.xlu0 %v360
      %v362 = vpop.xlane.xlu0 %361
      %v363 = vrcp.pop %v362
      %v364 = vpack.c.bf16 %v359, %v359
      %365 = vrot.lane.b32.xlu0 %v332, 48
      %v366 = vpop.permute.xlu0 %365
      %v368 = vsel %vm195, %v364, 0
      %v371 = vsel %vm231, %v366, 0
      %373 = vmatpush.bf16.msra.mxu0 0
      %374 = vmatpush.bf16.msra.mxu0 0
      %375 = vmatpush.bf16.msra.mxu0 0
      %376 = vmatpush.bf16.msra.mxu0 0
      %377 = vmatpush.bf16.msra.mxu0 0
      %378 = vmatpush.bf16.msra.mxu0 0
      %379 = vmatpush.bf16.msra.mxu0 0
      %380 = vmatpush.bf16.msra.mxu0 %v371
      %381 = vmatmul.bf16.gmra.mxu0 %v368
      %v382 = vpop.f32.mrf.mxu0
      %v383 = vadd.f32 0.0, %v382
      %v384 = vpop.f32.mrf.mxu0
      %385 = vdwg.mxu0
      %v386 = vmul.f32 %v383, %v363
      %v387 = vpack.c.bf16 %v386, %v386
      %389 = vrot.lane.b32.xlu0 %v387, 16
      %v390 = vpop.permute.xlu0 %389
      %vm392 = vcmask 191616
      %393 = vst.msk [vmem:[%s186] sm:$0xf] %vm392, %v390
      %v394 = vld [vmem:[%s175] sm:$0xf]
      %v395 = vld [vmem:[%s179] sm:$0xf]
      %v397 = vunpack.c.l.b16 %v394
      %v398 = vpack.c.b16 %v397, %v397
      %399 = vrot.lane.b32.xlu0 %v398, 104
      %v400 = vpop.permute.xlu0 %399
      %v402 = vunpack.c.l.b16 %v395
      %v403 = vpack.c.b16 %v402, %v402
      %404 = vrot.lane.b32.xlu0 %v403, 72
      %v405 = vpop.permute.xlu0 %404
      %v407 = vsel %vm195, %v400, 0
      %v410 = vsel %vm195, %v405, 0
      %412 = vmatpush.bf16.xpose.msra.mxu0 0
      %413 = vmatpush.bf16.xpose.msra.mxu0 0
      %414 = vmatpush.bf16.xpose.msra.mxu0 0
      %415 = vmatpush.bf16.xpose.msra.mxu0 0
      %416 = vmatpush.bf16.xpose.msra.mxu0 0
      %417 = vmatpush.bf16.xpose.msra.mxu0 0
      %418 = vmatpush.bf16.xpose.msra.mxu0 0
      %419 = vmatpush.bf16.xpose.msra.mxu0 %v410
      %420 = vmatmul.bf16.gmra.mxu0 %v407
      %v421 = vpop.f32.mrf.mxu0
      %v422 = vadd.f32 0.0, %v421
      %v423 = vpop.f32.mrf.mxu0
      %424 = vdwg.mxu0
      %v425 = vsel %vm195, %v422, -inf
      %426 = vmax.xlane.f32.xlu0 %v425
      %v427 = vpop.xlane.xlu0 %426
      %v428 = vsub.f32 %v422, %v427
      %v429 = vmul.f32 %v428, 1.442695
      %v430 = vpow.pop %v429
      %v431 = vsel %vm195, %v430, 0.0
      %432 = vadd.xlane.f32.xlu0 %v431
      %v433 = vpop.xlane.xlu0 %432
      %v434 = vrcp.pop %v433
      %v435 = vpack.c.bf16 %v430, %v430
      %436 = vrot.lane.b32.xlu0 %v403, 40
      %v437 = vpop.permute.xlu0 %436
      %v439 = vsel %vm195, %v435, 0
      %v442 = vsel %vm231, %v437, 0
      %444 = vmatpush.bf16.msra.mxu0 0
      %445 = vmatpush.bf16.msra.mxu0 0
      %446 = vmatpush.bf16.msra.mxu0 0
      %447 = vmatpush.bf16.msra.mxu0 0
      %448 = vmatpush.bf16.msra.mxu0 0
      %449 = vmatpush.bf16.msra.mxu0 0
      %450 = vmatpush.bf16.msra.mxu0 0
      %451 = vmatpush.bf16.msra.mxu0 %v442
      %452 = vmatmul.bf16.gmra.mxu0 %v439
      %v453 = vpop.f32.mrf.mxu0
      %v454 = vadd.f32 0.0, %v453
      %v455 = vpop.f32.mrf.mxu0
      %456 = vdwg.mxu0
      %v457 = vmul.f32 %v454, %v434
      %v458 = vpack.c.bf16 %v457, %v457
      %460 = vrot.lane.b32.xlu0 %v458, 24
      %v461 = vpop.permute.xlu0 %460
      %vm463 = vcmask 257216
      %464 = vst.msk [vmem:[%s186] sm:$0xf] %vm463, %v461
      %p465 = scmp.lt.s32.totalorder %s17, 1
      %s466 = scalar_select %p465, %s17, 1
      %p467 = scmp.lt.s32.totalorder %s18, 0
      %s468 = scalar_select %p467, %s18, 0
      %s469 = sadd.s32 %s468, %s466
      %s470 = smul.addr %s469, 4
      %s471 = scalar_lea.vmem %s2, %s470
      // Predicated region
      $region29: #{transformer_forward.11} parent=27 // pred_check
        %p472 = pneg %p99
      $region30: #{transformer_forward.11} parent=27 // pred_check_branch
        %474 = sbr.rel (%p472) target = $region32
      $region31: #{transformer_forward.11} parent=27 // pred_region
        _
      $region32: #{transformer_forward.11} parent=27 // pred_fallthru
        _
    $region28: #{transformer_forward.11} parent=5 // pred_fallthru
      _
    %p475 = scmp.le.s32.totalorder 2, %s8
    // Predicated region
    $region33: #{transformer_forward.11} parent=5 // pred_check
      %p476 = pneg %p475
    $region34: #{transformer_forward.11} parent=5 // pred_check_branch
      %478 = sbr.rel (%p476) target = $region36
    $region35: #{transformer_forward.11} parent=5 // pred_region
      %s479 = ssub.s32 %s8, 2
      // Predicated region
      $region37: #{transformer_forward.11} parent=35 // pred_check
        %p480 = pneg %p105
      $region38: #{transformer_forward.11} parent=35 // pred_check_branch
        %482 = sbr.rel (%p480) target = $region40
      $region39: #{transformer_forward.11} parent=35 // pred_region
        %p483 = scmp.lt.s32.totalorder %s19, 1
        %s484 = scalar_select %p483, %s19, 1
        %p485 = scmp.lt.s32.totalorder %s20, 0
        %s486 = scalar_select %p485, %s20, 0
        %s487 = sadd.s32 %s486, %s484
        %s488 = smul.addr %s487, 4
        %s489 = scalar_lea.vmem %s2, %s488
      $region40: #{transformer_forward.11} parent=35 // pred_fallthru
        _
    $region36: #{transformer_forward.11} parent=5 // pred_fallthru
      _
  $region6: #{transformer_forward.11} parent=0 // loop_footer
    %s12 = sadd.s32 1, %s8
  $region7: #{transformer_forward.11} parent=0 // loop_footer_branch
    %7 = sbr.rel target = $region3
  $region8: #{transformer_forward.11} parent=0 // loop_exit
    _

// kernel: transformer_forward.12
$region0: #{transformer_forward.12}
  #allocation0 [shape = 'u32[]', space=smem, size = 0x4, offset = 0x4, fixed_abs, tag = 'smem constant byte address 0x4 - core index']
  #allocation1 [shape = 'u32[72,128]{1,0:T(1,128)}', space=vmem, size = 0x9000, scoped, tag = 'internal scratch']
  #allocation2 [shape = 'f32[16,32]{1,0:T(8,128)}', space=vmem, size = 0x2000, scoped, tag = 'scratch operand']
  %s0 = inlined_call_operand.vmem [shape: bf16[16,32], index: 0, kind: input, shape index: {}]
  %s1 = inlined_call_operand.hbm [shape: bf16[32,32], index: 1, kind: input, shape index: {}]
  %s2 = inlined_call_operand.vmem [shape: f32[1,32], index: 2, kind: input, shape index: {}]
  %s3 = inlined_call_operand.vmem [shape: f32[16,32], index: 3, kind: input, shape index: {}]
  %s4 = inlined_call_operand.vmem [shape: f32[16,32], index: 4, kind: output, shape index: {}]
  %s5 = sld [smem:[#allocation0]]
  $region38: #{transformer_forward.12} parent=0
    _
  %s7 = ssub.s32 1, %s5
  %s8 = scalar_select 0, %s7, %s5
  $region1: #{transformer_forward.12} parent=0
    #allocation3 [shape = 'u8[8192]{0}', space=vmem, size = 0x2000, scoped, tag = 'input window, operand 1, single buffered']
    #allocation4 [shape = 's32[1]{0}', space=sflag, size = 0x4, scoped, tag = 'scoped memory for transformer_forward.12']
    %9 = vsyncpa [#allocation4], 0
    // Predicated region
    $region2: #{transformer_forward.12} parent=1 // pred_check
      _
    $region3: #{transformer_forward.12} parent=1 // pred_check_branch
      %11 = sbr.rel (0) target = $region5
    $region4: #{transformer_forward.12} parent=1 // pred_region
      _
    $region5: #{transformer_forward.12} parent=1 // pred_fallthru
      _
    // Predicated region
    $region6: #{transformer_forward.12} parent=1 // pred_check
      _
    $region7: #{transformer_forward.12} parent=1 // pred_check_branch
      %13 = sbr.rel (0) target = $region9
    $region8: #{transformer_forward.12} parent=1 // pred_region
      %15 = vsyncadd [#allocation4], 0
      %s16 = sshll.u32 %s1, 4
      %s17 = int_to_ptr.hbm [resolvable:$true] %s16
      %s18 = sshll.u32 [#allocation3], 4
      %s19 = int_to_ptr.vmem [resolvable:$true] %s18
      %24 = dma.hbm_to_vmem [thread:$0]  %s17, 256, %s19, [#allocation4], 64, 64, 4
    $region9: #{transformer_forward.12} parent=1 // pred_fallthru
      _
    // Predicated region
    $region10: #{transformer_forward.12} parent=1 // pred_check
      _
    $region11: #{transformer_forward.12} parent=1 // pred_check_branch
      %26 = sbr.rel (0) target = $region13
    $region12: #{transformer_forward.12} parent=1 // pred_region
      _
    $region13: #{transformer_forward.12} parent=1 // pred_fallthru
      _
    // Predicated region
    $region14: #{transformer_forward.12} parent=1 // pred_check
      _
    $region15: #{transformer_forward.12} parent=1 // pred_check_branch
      %28 = sbr.rel (0) target = $region17
    $region16: #{transformer_forward.12} parent=1 // pred_region
      _
    $region17: #{transformer_forward.12} parent=1 // pred_fallthru
      _
    // Predicated region
    $region18: #{transformer_forward.12} parent=1 // pred_check
      _
    $region19: #{transformer_forward.12} parent=1 // pred_check_branch
      %30 = sbr.rel (0) target = $region21
    $region20: #{transformer_forward.12} parent=1 // pred_region
      %32 = dma.done [#allocation4], 256
    $region21: #{transformer_forward.12} parent=1 // pred_fallthru
      _
    %p34 = scmp.eq.s32.totalorder 0, 0
    // Predicated region
    $region22: #{transformer_forward.12} parent=1 // pred_check
      %p35 = pneg %p34
    $region23: #{transformer_forward.12} parent=1 // pred_check_branch
      %37 = sbr.rel (%p35) target = $region25
    $region24: #{transformer_forward.12} parent=1 // pred_region
      %vm38 = vcmask 261120
      %39 = vst.msk [vmem:[#allocation2] sm:$0xff] %vm38, 0.0
      %40 = vst.msk [vmem:[#allocation2 + $0x8] sm:$0xff] %vm38, 0.0
    $region25: #{transformer_forward.12} parent=1 // pred_fallthru
      _
    %v41 = vld [vmem:[#allocation2] sm:$0xff]
    %v42 = vld [vmem:[#allocation2 + $0x8] sm:$0xff]
    %v43 = vld [vmem:[%s0] sm:$0xf]
    %v44 = vld [vmem:[%s0 + $0x4] sm:$0xf]
    %v45 = vld [vmem:[#allocation3] sm:$0xf]
    %v46 = vld [vmem:[#allocation3 + $0x4] sm:$0xf]
    %v47 = vld [vmem:[#allocation3 + $0x8] sm:$0xf]
    %v48 = vld [vmem:[#allocation3 + $0xc] sm:$0xf]
    %v51 = vunpack.c.l.b16 %v43
    %v52 = vunpack.c.l.b16 %v44
    %v53 = vpack.c.b16 %v52, %v51
    %v58 = vunpack.c.l.b16 %v45
    %v59 = vunpack.c.l.b16 %v46
    %v60 = vunpack.c.l.b16 %v47
    %v61 = vunpack.c.l.b16 %v48
    %v62 = vpack.c.b16 %v59, %v58
    %v63 = vpack.c.b16 %v61, %v60
    %vm66 = vcmask 261120
    %v68 = vsel %vm66, %v53, 0
    %70 = vmatpush.bf16.msra.mxu0 0
    %71 = vmatpush.bf16.msra.mxu0 0
    %72 = vmatpush.bf16.msra.mxu0 0
    %73 = vmatpush.bf16.msra.mxu0 0
    %74 = vmatpush.bf16.msra.mxu0 0
    %75 = vmatpush.bf16.msra.mxu0 0
    %76 = vmatpush.bf16.msra.mxu0 %v63
    %77 = vmatpush.bf16.msra.mxu0 %v62
    %78 = vmatmul.bf16.gmra.mxu0 %v68
    %v79 = vpop.f32.mrf.mxu0
    %v80 = vadd.f32 0.0, %v79
    %v81 = vpop.f32.mrf.mxu0
    %v82 = vadd.f32 0.0, %v81
    %83 = vdwg.mxu0
    %v84 = vadd.f32 %v41, %v80
    %v85 = vadd.f32 %v42, %v82
    %86 = vst.msk [vmem:[#allocation2] sm:$0xff] %vm66, %v84
    %87 = vst.msk [vmem:[#allocation2 + $0x8] sm:$0xff] %vm66, %v85
    // Predicated region
    $region26: #{transformer_forward.12} parent=1 // pred_check
      %p88 = pneg %p34
    $region27: #{transformer_forward.12} parent=1 // pred_check_branch
      %90 = sbr.rel (%p88) target = $region29
    $region28: #{transformer_forward.12} parent=1 // pred_region
      %v91 = vld [vmem:[#allocation2] sm:$0xff]
      %v92 = vld [vmem:[#allocation2 + $0x8] sm:$0xff]
      %v93 = vld [vmem:[%s2] sm:$0x1]
      %v95 = vperm.slane %v93, 0
      %v97 = vadd.f32 %v91, %v95
      %v98 = vadd.f32 %v92, %v95
      %v99 = vld [vmem:[%s3] sm:$0xff]
      %v100 = vld [vmem:[%s3 + $0x8] sm:$0xff]
      %v101 = vadd.f32 %v97, %v99
      %v102 = vadd.f32 %v98, %v100
      %103 = vst.msk [vmem:[%s4] sm:$0xff] %vm66, %v101
      %104 = vst.msk [vmem:[%s4 + $0x8] sm:$0xff] %vm66, %v102
    $region29: #{transformer_forward.12} parent=1 // pred_fallthru
      _
    // Predicated region
    $region30: #{transformer_forward.12} parent=1 // pred_check
      _
    $region31: #{transformer_forward.12} parent=1 // pred_check_branch
      %106 = sbr.rel (0) target = $region33
    $region32: #{transformer_forward.12} parent=1 // pred_region
      _
    $region33: #{transformer_forward.12} parent=1 // pred_fallthru
      _
    // Predicated region
    $region34: #{transformer_forward.12} parent=1 // pred_check
      _
    $region35: #{transformer_forward.12} parent=1 // pred_check_branch
      %108 = sbr.rel (0) target = $region37
    $region36: #{transformer_forward.12} parent=1 // pred_region
      _
    $region37: #{transformer_forward.12} parent=1 // pred_fallthru
      _
    %109 = vsyncpa [#allocation4], 1

// kernel: transformer_forward.10
$region0: #{transformer_forward.10}
  #allocation0 [shape = 'u32[]', space=smem, size = 0x4, offset = 0x4, fixed_abs, tag = 'smem constant byte address 0x4 - core index']
  #allocation1 [shape = 'u32[72,128]{1,0:T(1,128)}', space=vmem, size = 0x9000, scoped, tag = 'internal scratch']
  #allocation2 [shape = 'bf16[16,32]{1,0:T(8,128)(2,1)}', space=vmem, size = 0x1000, scoped, tag = 'scratch operand']
  %s0 = inlined_call_operand.vmem [shape: f32[16,32], index: 0, kind: input, shape index: {}]
  %s1 = inlined_call_operand.vmem [shape: f32[1,32], index: 1, kind: input, shape index: {}]
  %s2 = inlined_call_operand.vmem [shape: f32[1,32], index: 2, kind: input, shape index: {}]
  %s3 = inlined_call_operand.vmem [shape: bf16[32,96], index: 3, kind: input, shape index: {}]
  %s4 = inlined_call_operand.vmem [shape: f32[1,96], index: 4, kind: input, shape index: {}]
  %s5 = inlined_call_operand.vmem [shape: bf16[16,96], index: 5, kind: output, shape index: {}]
  %s6 = sld [smem:[#allocation0]]
  $region34: #{transformer_forward.10} parent=0
    _
  %s8 = ssub.s32 1, %s6
  %s9 = scalar_select 0, %s8, %s6
  // Predicated region
  $region2: #{transformer_forward.10} parent=0 // pred_check
    _
  $region3: #{transformer_forward.10} parent=0 // pred_check_branch
    %11 = sbr.rel (0) target = $region5
  $region4: #{transformer_forward.10} parent=0 // pred_region
    _
  $region5: #{transformer_forward.10} parent=0 // pred_fallthru
    _
  // Predicated region
  $region6: #{transformer_forward.10} parent=0 // pred_check
    _
  $region7: #{transformer_forward.10} parent=0 // pred_check_branch
    %13 = sbr.rel (0) target = $region9
  $region8: #{transformer_forward.10} parent=0 // pred_region
    _
  $region9: #{transformer_forward.10} parent=0 // pred_fallthru
    _
  // Predicated region
  $region10: #{transformer_forward.10} parent=0 // pred_check
    _
  $region11: #{transformer_forward.10} parent=0 // pred_check_branch
    %15 = sbr.rel (0) target = $region13
  $region12: #{transformer_forward.10} parent=0 // pred_region
    _
  $region13: #{transformer_forward.10} parent=0 // pred_fallthru
    _
  // Predicated region
  $region14: #{transformer_forward.10} parent=0 // pred_check
    _
  $region15: #{transformer_forward.10} parent=0 // pred_check_branch
    %17 = sbr.rel (0) target = $region17
  $region16: #{transformer_forward.10} parent=0 // pred_region
    _
  $region17: #{transformer_forward.10} parent=0 // pred_fallthru
    _
  // Predicated region
  $region18: #{transformer_forward.10} parent=0 // pred_check
    _
  $region19: #{transformer_forward.10} parent=0 // pred_check_branch
    %19 = sbr.rel (0) target = $region21
  $region20: #{transformer_forward.10} parent=0 // pred_region
    _
  $region21: #{transformer_forward.10} parent=0 // pred_fallthru
    _
  %p21 = scmp.eq.s32.totalorder 0, 0
  // Predicated region
  $region22: #{transformer_forward.10} parent=0 // pred_check
    %p22 = pneg %p21
  $region23: #{transformer_forward.10} parent=0 // pred_check_branch
    %24 = sbr.rel (%p22) target = $region25
  $region24: #{transformer_forward.10} parent=0 // pred_region
    %v25 = vld [vmem:[%s0] sm:$0xff]
    %v26 = vld [vmem:[%s0 + $0x8] sm:$0xff]
    %vm27 = vcmask 261120
    %v28 = vsel %vm27, %v25, 0.0
    %29 = vadd.xlane.f32.xlu0 %v28
    %v30 = vpop.xlane.xlu0 %29
    %v31 = vsel %vm27, %v26, 0.0
    %32 = vadd.xlane.f32.xlu0 %v31
    %v33 = vpop.xlane.xlu0 %32
    %v34 = vrcp.pop 32.0
    %v35 = vmul.f32 32.0, %v34
    %v36 = vsub.f32 1.0, %v35
    %v37 = vmul.f32 %v34, %v36
    %v38 = vadd.f32 %v34, %v37
    %vm39 = vweird.f32 %v34
    %v40 = vsel %vm39, %v34, %v38
    %v41 = vmul.f32 %v30, %v40
    %v42 = vmul.f32 %v33, %v40
    %v43 = vsub.f32 %v25, %v41
    %v44 = vsub.f32 %v26, %v42
    %v45 = vmul.f32 %v43, %v43
    %v46 = vmul.f32 %v44, %v44
    %v47 = vsel %vm27, %v45, 0.0
    %48 = vadd.xlane.f32.xlu0 %v47
    %v49 = vpop.xlane.xlu0 %48
    %v50 = vsel %vm27, %v46, 0.0
    %51 = vadd.xlane.f32.xlu0 %v50
    %v52 = vpop.xlane.xlu0 %51
    %v53 = vmul.f32 %v49, %v40
    %v54 = vmul.f32 %v52, %v40
    %v55 = vadd.f32 %v53, 1e-05
    %v56 = vadd.f32 %v54, 1e-05
    %v57 = vrsqrt.pop %v55
    %v58 = vmul.f32 %v57, %v55
    %v59 = vmul.f32 %v58, %v57
    %v60 = vmul.f32 0.5, %v59
    %v61 = vsub.f32 1.5, %v60
    %v62 = vmul.f32 %v57, %v61
    %vm63 = vweird.f32 %v55
    %vm64 = vweird.f32 %v57
    %vm65 = vmor %vm63, %vm64
    %v66 = vsel %vm65, %v57, %v62
    %v67 = vrsqrt.pop %v56
    %v68 = vmul.f32 %v67, %v56
    %v69 = vmul.f32 %v68, %v67
    %v70 = vmul.f32 0.5, %v69
    %v71 = vsub.f32 1.5, %v70
    %v72 = vmul.f32 %v67, %v71
    %vm73 = vweird.f32 %v56
    %vm74 = vweird.f32 %v67
    %vm75 = vmor %vm73, %vm74
    %v76 = vsel %vm75, %v67, %v72
    %v77 = vmul.f32 %v43, %v66
    %v78 = vmul.f32 %v44, %v76
    %v79 = vld [vmem:[%s1] sm:$0x1]
    %v81 = vperm.slane %v79, 0
    %v83 = vmul.f32 %v77, %v81
    %v84 = vmul.f32 %v78, %v81
    %v85 = vld [vmem:[%s2] sm:$0x1]
    %v87 = vperm.slane %v85, 0
    %v89 = vadd.f32 %v83, %v87
    %v90 = vadd.f32 %v84, %v87
    %v91 = vpack.c.bf16 %v89, %v89
    %v92 = vpack.c.bf16 %v90, %v90
    %vm93 = vcmask 257024
    %94 = vst.msk [vmem:[#allocation2] sm:$0xf] %vm93, %v91
    %95 = vst.msk [vmem:[#allocation2 + $0x4] sm:$0xf] %vm93, %v92
  $region25: #{transformer_forward.10} parent=0 // pred_fallthru
    _
  %v96 = vld [vmem:[#allocation2] sm:$0xf]
  %v97 = vld [vmem:[#allocation2 + $0x4] sm:$0xf]
  %v98 = vld [vmem:[%s3] sm:$0xf]
  %v99 = vld [vmem:[%s3 + $0x4] sm:$0xf]
  %v100 = vld [vmem:[%s3 + $0x8] sm:$0xf]
  %v101 = vld [vmem:[%s3 + $0xc] sm:$0xf]
  %v102 = vld [vmem:[%s4] sm:$0x1]
  %v104 = vperm.slane %v102, 0
  %v108 = vunpack.c.l.b16 %v96
  %v109 = vunpack.c.l.b16 %v97
  %v110 = vpack.c.b16 %v109, %v108
  %v115 = vunpack.c.l.b16 %v98
  %v116 = vunpack.c.l.b16 %v99
  %v117 = vunpack.c.l.b16 %v100
  %v118 = vunpack.c.l.b16 %v101
  %v119 = vpack.c.b16 %v116, %v115
  %v120 = vpack.c.b16 %v118, %v117
  %vm123 = vcmask 261120
  %v125 = vsel %vm123, %v110, 0
  %127 = vmatpush.bf16.msra.mxu0 0
  %128 = vmatpush.bf16.msra.mxu0 0
  %129 = vmatpush.bf16.msra.mxu0 0
  %130 = vmatpush.bf16.msra.mxu0 0
  %131 = vmatpush.bf16.msra.mxu0 0
  %132 = vmatpush.bf16.msra.mxu0 0
  %133 = vmatpush.bf16.msra.mxu0 %v120
  %134 = vmatpush.bf16.msra.mxu0 %v119
  %135 = vmatmul.bf16.gmra.mxu0 %v125
  %v136 = vpop.f32.mrf.mxu0
  %v137 = vadd.f32 %v104, %v136
  %v138 = vpop.f32.mrf.mxu0
  %v139 = vadd.f32 %v104, %v138
  %140 = vdwg.mxu0
  %v141 = vpack.c.bf16 %v137, %v137
  %v142 = vpack.c.bf16 %v139, %v139
  %vm143 = vcmask 781312
  %144 = vst.msk [vmem:[%s5] sm:$0xf] %vm143, %v141
  %145 = vst.msk [vmem:[%s5 + $0x4] sm:$0xf] %vm143, %v142
  // Predicated region
  $region26: #{transformer_forward.10} parent=0 // pred_check
    _
  $region27: #{transformer_forward.10} parent=0 // pred_check_branch
    %147 = sbr.rel (0) target = $region29
  $region28: #{transformer_forward.10} parent=0 // pred_region
    _
  $region29: #{transformer_forward.10} parent=0 // pred_fallthru
    _
  // Predicated region
  $region30: #{transformer_forward.10} parent=0 // pred_check
    _
  $region31: #{transformer_forward.10} parent=0 // pred_check_branch
    %149 = sbr.rel (0) target = $region33
  $region32: #{transformer_forward.10} parent=0 // pred_region
    _
  $region33: #{transformer_forward.10} parent=0 // pred_fallthru
    _

// kernel: transformer_forward.13
$region0: #{transformer_forward.13}
  #allocation0 [shape = 'u32[]', space=smem, size = 0x4, offset = 0x4, fixed_abs, tag = 'smem constant byte address 0x4 - core index']
  #allocation1 [shape = 'u32[72,128]{1,0:T(1,128)}', space=vmem, size = 0x9000, scoped, tag = 'internal scratch']
  #allocation2 [shape = 'bf16[16,32]{1,0:T(8,128)(2,1)}', space=vmem, size = 0x1000, scoped, tag = 'scratch operand']
  %s0 = inlined_call_operand.vmem [shape: f32[16,32], index: 0, kind: input, shape index: {}]
  %s1 = inlined_call_operand.vmem [shape: f32[1,32], index: 1, kind: input, shape index: {}]
  %s2 = inlined_call_operand.vmem [shape: f32[1,32], index: 2, kind: input, shape index: {}]
  %s3 = inlined_call_operand.hbm [shape: bf16[32,128], index: 3, kind: input, shape index: {}]
  %s4 = inlined_call_operand.vmem [shape: f32[1,128], index: 4, kind: input, shape index: {}]
  %s5 = inlined_call_operand.vmem [shape: bf16[16,128], index: 5, kind: output, shape index: {}]
  %s6 = sld [smem:[#allocation0]]
  $region38: #{transformer_forward.13} parent=0
    _
  %s8 = ssub.s32 1, %s6
  %s9 = scalar_select 0, %s8, %s6
  $region1: #{transformer_forward.13} parent=0
    #allocation3 [shape = 'u8[8192]{0}', space=vmem, size = 0x2000, scoped, tag = 'input window, operand 3, single buffered']
    #allocation4 [shape = 's32[1]{0}', space=sflag, size = 0x4, scoped, tag = 'scoped memory for transformer_forward.13']
    %10 = vsyncpa [#allocation4], 0
    // Predicated region
    $region2: #{transformer_forward.13} parent=1 // pred_check
      _
    $region3: #{transformer_forward.13} parent=1 // pred_check_branch
      %12 = sbr.rel (0) target = $region5
    $region4: #{transformer_forward.13} parent=1 // pred_region
      _
    $region5: #{transformer_forward.13} parent=1 // pred_fallthru
      _
    // Predicated region
    $region6: #{transformer_forward.13} parent=1 // pred_check
      _
    $region7: #{transformer_forward.13} parent=1 // pred_check_branch
      %14 = sbr.rel (0) target = $region9
    $region8: #{transformer_forward.13} parent=1 // pred_region
      _
    $region9: #{transformer_forward.13} parent=1 // pred_fallthru
      _
    // Predicated region
    $region10: #{transformer_forward.13} parent=1 // pred_check
      _
    $region11: #{transformer_forward.13} parent=1 // pred_check_branch
      %16 = sbr.rel (0) target = $region13
    $region12: #{transformer_forward.13} parent=1 // pred_region
      _
    $region13: #{transformer_forward.13} parent=1 // pred_fallthru
      _
    // Predicated region
    $region14: #{transformer_forward.13} parent=1 // pred_check
      _
    $region15: #{transformer_forward.13} parent=1 // pred_check_branch
      %18 = sbr.rel (0) target = $region17
    $region16: #{transformer_forward.13} parent=1 // pred_region
      %20 = vsyncadd [#allocation4], 0
      %s21 = sshll.u32 %s3, 4
      %s22 = int_to_ptr.hbm [resolvable:$true] %s21
      %s23 = sshll.u32 [#allocation3], 4
      %s24 = int_to_ptr.vmem [resolvable:$true] %s23
      %29 = dma.hbm_to_vmem [thread:$0]  %s22, 256, %s24, [#allocation4], 64, 64, 4
    $region17: #{transformer_forward.13} parent=1 // pred_fallthru
      _
    // Predicated region
    $region18: #{transformer_forward.13} parent=1 // pred_check
      _
    $region19: #{transformer_forward.13} parent=1 // pred_check_branch
      %31 = sbr.rel (0) target = $region21
    $region20: #{transformer_forward.13} parent=1 // pred_region
      _
    $region21: #{transformer_forward.13} parent=1 // pred_fallthru
      _
    // Predicated region
    $region22: #{transformer_forward.13} parent=1 // pred_check
      _
    $region23: #{transformer_forward.13} parent=1 // pred_check_branch
      %33 = sbr.rel (0) target = $region25
    $region24: #{transformer_forward.13} parent=1 // pred_region
      %35 = dma.done [#allocation4], 256
    $region25: #{transformer_forward.13} parent=1 // pred_fallthru
      _
    %p37 = scmp.eq.s32.totalorder 0, 0
    // Predicated region
    $region26: #{transformer_forward.13} parent=1 // pred_check
      %p38 = pneg %p37
    $region27: #{transformer_forward.13} parent=1 // pred_check_branch
      %40 = sbr.rel (%p38) target = $region29
    $region28: #{transformer_forward.13} parent=1 // pred_region
      %v41 = vld [vmem:[%s0] sm:$0xff]
      %v42 = vld [vmem:[%s0 + $0x8] sm:$0xff]
      %vm43 = vcmask 261120
      %v44 = vsel %vm43, %v41, 0.0
      %45 = vadd.xlane.f32.xlu0 %v44
      %v46 = vpop.xlane.xlu0 %45
      %v47 = vsel %vm43, %v42, 0.0
      %48 = vadd.xlane.f32.xlu0 %v47
      %v49 = vpop.xlane.xlu0 %48
      %v50 = vrcp.pop 32.0
      %v51 = vmul.f32 32.0, %v50
      %v52 = vsub.f32 1.0, %v51
      %v53 = vmul.f32 %v50, %v52
      %v54 = vadd.f32 %v50, %v53
      %vm55 = vweird.f32 %v50
      %v56 = vsel %vm55, %v50, %v54
      %v57 = vmul.f32 %v46, %v56
      %v58 = vmul.f32 %v49, %v56
      %v59 = vsub.f32 %v41, %v57
      %v60 = vsub.f32 %v42, %v58
      %v61 = vmul.f32 %v59, %v59
      %v62 = vmul.f32 %v60, %v60
      %v63 = vsel %vm43, %v61, 0.0
      %64 = vadd.xlane.f32.xlu0 %v63
      %v65 = vpop.xlane.xlu0 %64
      %v66 = vsel %vm43, %v62, 0.0
      %67 = vadd.xlane.f32.xlu0 %v66
      %v68 = vpop.xlane.xlu0 %67
      %v69 = vmul.f32 %v65, %v56
      %v70 = vmul.f32 %v68, %v56
      %v71 = vadd.f32 %v69, 1e-05
      %v72 = vadd.f32 %v70, 1e-05
      %v73 = vrsqrt.pop %v71
      %v74 = vmul.f32 %v73, %v71
      %v75 = vmul.f32 %v74, %v73
      %v76 = vmul.f32 0.5, %v75
      %v77 = vsub.f32 1.5, %v76
      %v78 = vmul.f32 %v73, %v77
      %vm79 = vweird.f32 %v71
      %vm80 = vweird.f32 %v73
      %vm81 = vmor %vm79, %vm80
      %v82 = vsel %vm81, %v73, %v78
      %v83 = vrsqrt.pop %v72
      %v84 = vmul.f32 %v83, %v72
      %v85 = vmul.f32 %v84, %v83
      %v86 = vmul.f32 0.5, %v85
      %v87 = vsub.f32 1.5, %v86
      %v88 = vmul.f32 %v83, %v87
      %vm89 = vweird.f32 %v72
      %vm90 = vweird.f32 %v83
      %vm91 = vmor %vm89, %vm90
      %v92 = vsel %vm91, %v83, %v88
      %v93 = vmul.f32 %v59, %v82
      %v94 = vmul.f32 %v60, %v92
      %v95 = vld [vmem:[%s1] sm:$0x1]
      %v97 = vperm.slane %v95, 0
      %v99 = vmul.f32 %v93, %v97
      %v100 = vmul.f32 %v94, %v97
      %v101 = vld [vmem:[%s2] sm:$0x1]
      %v103 = vperm.slane %v101, 0
      %v105 = vadd.f32 %v99, %v103
      %v106 = vadd.f32 %v100, %v103
      %v107 = vpack.c.bf16 %v105, %v105
      %v108 = vpack.c.bf16 %v106, %v106
      %vm109 = vcmask 257024
      %110 = vst.msk [vmem:[#allocation2] sm:$0xf] %vm109, %v107
      %111 = vst.msk [vmem:[#allocation2 + $0x4] sm:$0xf] %vm109, %v108
    $region29: #{transformer_forward.13} parent=1 // pred_fallthru
      _
    %v112 = vld [vmem:[#allocation2] sm:$0xf]
    %v113 = vld [vmem:[#allocation2 + $0x4] sm:$0xf]
    %v114 = vld [vmem:[#allocation3] sm:$0xf]
    %v115 = vld [vmem:[#allocation3 + $0x4] sm:$0xf]
    %v116 = vld [vmem:[#allocation3 + $0x8] sm:$0xf]
    %v117 = vld [vmem:[#allocation3 + $0xc] sm:$0xf]
    %v118 = vld [vmem:[%s4] sm:$0x1]
    %v120 = vperm.slane %v118, 0
    %v124 = vunpack.c.l.b16 %v112
    %v125 = vunpack.c.l.b16 %v113
    %v126 = vpack.c.b16 %v125, %v124
    %v131 = vunpack.c.l.b16 %v114
    %v132 = vunpack.c.l.b16 %v115
    %v133 = vunpack.c.l.b16 %v116
    %v134 = vunpack.c.l.b16 %v117
    %v135 = vpack.c.b16 %v132, %v131
    %v136 = vpack.c.b16 %v134, %v133
    %vm139 = vcmask 261120
    %v141 = vsel %vm139, %v126, 0
    %143 = vmatpush.bf16.msra.mxu0 0
    %144 = vmatpush.bf16.msra.mxu0 0
    %145 = vmatpush.bf16.msra.mxu0 0
    %146 = vmatpush.bf16.msra.mxu0 0
    %147 = vmatpush.bf16.msra.mxu0 0
    %148 = vmatpush.bf16.msra.mxu0 0
    %149 = vmatpush.bf16.msra.mxu0 %v136
    %150 = vmatpush.bf16.msra.mxu0 %v135
    %151 = vmatmul.bf16.gmra.mxu0 %v141
    %v152 = vpop.f32.mrf.mxu0
    %v153 = vadd.f32 %v120, %v152
    %v154 = vpop.f32.mrf.mxu0
    %v155 = vadd.f32 %v120, %v154
    %156 = vdwg.mxu0
    %v157 = vmul.f32 %v153, 1.702
    %v158 = vmul.f32 %v155, 1.702
    %v159 = vxor.u32 %v157, 2147483648
    %v160 = vxor.u32 %v158, 2147483648
    %v161 = vmul.f32 %v159, 1.442695
    %v162 = vpow.pop %v161
    %v163 = vmul.f32 %v160, 1.442695
    %v164 = vpow.pop %v163
    %v165 = vadd.f32 %v162, 1.0
    %v166 = vadd.f32 %v164, 1.0
    %v167 = vrcp.pop %v165
    %v168 = vmul.f32 %v165, %v167
    %v169 = vsub.f32 1.0, %v168
    %v170 = vmul.f32 %v167, %v169
    %v171 = vadd.f32 %v167, %v170
    %vm172 = vweird.f32 %v165
    %vm173 = vweird.f32 %v167
    %vm174 = vmor %vm172, %vm173
    %v175 = vsel %vm174, %v167, %v171
    %v176 = vand.u32 2147483647, %v165
    %vm177 = vcmp.eq.f32.partialorder %v176, 8.507059e+37
    %v178 = vand.u32 %v165, 2147483648
    %v179 = vor.u32 1.1754944e-38, %v178
    %v180 = vsel %vm177, %v179, %v175
    %v181 = vmul.f32 1.0, %v180
    %v182 = vrcp.pop %v166
    %v183 = vmul.f32 %v166, %v182
    %v184 = vsub.f32 1.0, %v183
    %v185 = vmul.f32 %v182, %v184
    %v186 = vadd.f32 %v182, %v185
    %vm187 = vweird.f32 %v166
    %vm188 = vweird.f32 %v182
    %vm189 = vmor %vm187, %vm188
    %v190 = vsel %vm189, %v182, %v186
    %v191 = vand.u32 2147483647, %v166
    %vm192 = vcmp.eq.f32.partialorder %v191, 8.507059e+37
    %v193 = vand.u32 %v166, 2147483648
    %v194 = vor.u32 1.1754944e-38, %v193
    %v195 = vsel %vm192, %v194, %v190
    %v196 = vmul.f32 1.0, %v195
    %v197 = vmul.f32 %v153, %v181
    %v198 = vmul.f32 %v155, %v196
    %v199 = vpack.c.bf16 %v197, %v197
    %v200 = vpack.c.bf16 %v198, %v198
    %201 = vst [vmem:[%s5] sm:$0xf] %v199
    %202 = vst [vmem:[%s5 + $0x4] sm:$0xf] %v200
    // Predicated region
    $region30: #{transformer_forward.13} parent=1 // pred_check
      _
    $region31: #{transformer_forward.13} parent=1 // pred_check_branch
      %204 = sbr.rel (0) target = $region33
    $region32: #{transformer_forward.13} parent=1 // pred_region
      _
    $region33: #{transformer_forward.13} parent=1 // pred_fallthru
      _
    // Predicated region
    $region34: #{transformer_forward.13} parent=1 // pred_check
      _
    $region35: #{transformer_forward.13} parent=1 // pred_check_branch
      %206 = sbr.rel (0) target = $region37
    $region36: #{transformer_forward.13} parent=1 // pred_region
      _
    $region37: #{transformer_forward.13} parent=1 // pred_fallthru
      _
    %207 = vsyncpa [#allocation4], 1

// kernel: transformer_forward.17
$region0: #{transformer_forward.17}
  #allocation0 [shape = 'u32[]', space=smem, size = 0x4, offset = 0x4, fixed_abs, tag = 'smem constant byte address 0x4 - core index']
  #allocation1 [shape = 'u32[72,128]{1,0:T(1,128)}', space=vmem, size = 0x9000, scoped, tag = 'internal scratch']
  #allocation2 [shape = 'f32[16,32]{1,0:T(8,128)}', space=vmem, size = 0x2000, scoped, tag = 'scratch operand']
  %s0 = inlined_call_operand.vmem [shape: bf16[16,32], index: 0, kind: input, shape index: {}]
  %s1 = inlined_call_operand.vmem [shape: bf16[32,32], index: 1, kind: input, shape index: {}]
  %s2 = inlined_call_operand.vmem [shape: f32[1,32], index: 2, kind: input, shape index: {}]
  %s3 = inlined_call_operand.vmem [shape: f32[16,32], index: 3, kind: input, shape index: {}]
  %s4 = inlined_call_operand.vmem [shape: f32[16,32], index: 4, kind: output, shape index: {}]
  %s5 = sld [smem:[#allocation0]]
  $region34: #{transformer_forward.17} parent=0
    _
  %s7 = ssub.s32 1, %s5
  %s8 = scalar_select 0, %s7, %s5
  // Predicated region
  $region2: #{transformer_forward.17} parent=0 // pred_check
    _
  $region3: #{transformer_forward.17} parent=0 // pred_check_branch
    %10 = sbr.rel (0) target = $region5
  $region4: #{transformer_forward.17} parent=0 // pred_region
    _
  $region5: #{transformer_forward.17} parent=0 // pred_fallthru
    _
  // Predicated region
  $region6: #{transformer_forward.17} parent=0 // pred_check
    _
  $region7: #{transformer_forward.17} parent=0 // pred_check_branch
    %12 = sbr.rel (0) target = $region9
  $region8: #{transformer_forward.17} parent=0 // pred_region
    _
  $region9: #{transformer_forward.17} parent=0 // pred_fallthru
    _
  // Predicated region
  $region10: #{transformer_forward.17} parent=0 // pred_check
    _
  $region11: #{transformer_forward.17} parent=0 // pred_check_branch
    %14 = sbr.rel (0) target = $region13
  $region12: #{transformer_forward.17} parent=0 // pred_region
    _
  $region13: #{transformer_forward.17} parent=0 // pred_fallthru
    _
  // Predicated region
  $region14: #{transformer_forward.17} parent=0 // pred_check
    _
  $region15: #{transformer_forward.17} parent=0 // pred_check_branch
    %16 = sbr.rel (0) target = $region17
  $region16: #{transformer_forward.17} parent=0 // pred_region
    _
  $region17: #{transformer_forward.17} parent=0 // pred_fallthru
    _
  %p18 = scmp.eq.s32.totalorder 0, 0
  // Predicated region
  $region18: #{transformer_forward.17} parent=0 // pred_check
    %p19 = pneg %p18
  $region19: #{transformer_forward.17} parent=0 // pred_check_branch
    %21 = sbr.rel (%p19) target = $region21
  $region20: #{transformer_forward.17} parent=0 // pred_region
    %vm22 = vcmask 261120
    %23 = vst.msk [vmem:[#allocation2] sm:$0xff] %vm22, 0.0
    %24 = vst.msk [vmem:[#allocation2 + $0x8] sm:$0xff] %vm22, 0.0
  $region21: #{transformer_forward.17} parent=0 // pred_fallthru
    _
  %v25 = vld [vmem:[#allocation2] sm:$0xff]
  %v26 = vld [vmem:[#allocation2 + $0x8] sm:$0xff]
  %v27 = vld [vmem:[%s0] sm:$0xf]
  %v28 = vld [vmem:[%s0 + $0x4] sm:$0xf]
  %v29 = vld [vmem:[%s1] sm:$0xf]
  %v30 = vld [vmem:[%s1 + $0x4] sm:$0xf]
  %v31 = vld [vmem:[%s1 + $0x8] sm:$0xf]
  %v32 = vld [vmem:[%s1 + $0xc] sm:$0xf]
  %v35 = vunpack.c.l.b16 %v27
  %v36 = vunpack.c.l.b16 %v28
  %v37 = vpack.c.b16 %v36, %v35
  %v42 = vunpack.c.l.b16 %v29
  %v43 = vunpack.c.l.b16 %v30
  %v44 = vunpack.c.l.b16 %v31
  %v45 = vunpack.c.l.b16 %v32
  %v46 = vpack.c.b16 %v43, %v42
  %v47 = vpack.c.b16 %v45, %v44
  %vm50 = vcmask 261120
  %v52 = vsel %vm50, %v37, 0
  %54 = vmatpush.bf16.msra.mxu0 0
  %55 = vmatpush.bf16.msra.mxu0 0
  %56 = vmatpush.bf16.msra.mxu0 0
  %57 = vmatpush.bf16.msra.mxu0 0
  %58 = vmatpush.bf16.msra.mxu0 0
  %59 = vmatpush.bf16.msra.mxu0 0
  %60 = vmatpush.bf16.msra.mxu0 %v47
  %61 = vmatpush.bf16.msra.mxu0 %v46
  %62 = vmatmul.bf16.gmra.mxu0 %v52
  %v63 = vpop.f32.mrf.mxu0
  %v64 = vadd.f32 0.0, %v63
  %v65 = vpop.f32.mrf.mxu0
  %v66 = vadd.f32 0.0, %v65
  %67 = vdwg.mxu0
  %v68 = vadd.f32 %v25, %v64
  %v69 = vadd.f32 %v26, %v66
  %70 = vst.msk [vmem:[#allocation2] sm:$0xff] %vm50, %v68
  %71 = vst.msk [vmem:[#allocation2 + $0x8] sm:$0xff] %vm50, %v69
  // Predicated region
  $region22: #{transformer_forward.17} parent=0 // pred_check
    %p72 = pneg %p18
  $region23: #{transformer_forward.17} parent=0 // pred_check_branch
    %74 = sbr.rel (%p72) target = $region25
  $region24: #{transformer_forward.17} parent=0 // pred_region
    %v75 = vld [vmem:[#allocation2] sm:$0xff]
    %v76 = vld [vmem:[#allocation2 + $0x8] sm:$0xff]
    %v77 = vld [vmem:[%s2] sm:$0x1]
    %v79 = vperm.slane %v77, 0
    %v81 = vadd.f32 %v75, %v79
    %v82 = vadd.f32 %v76, %v79
    %v83 = vld [vmem:[%s3] sm:$0xff]
    %v84 = vld [vmem:[%s3 + $0x8] sm:$0xff]
    %v85 = vadd.f32 %v81, %v83
    %v86 = vadd.f32 %v82, %v84
    %87 = vst.msk [vmem:[%s4] sm:$0xff] %vm50, %v85
    %88 = vst.msk [vmem:[%s4 + $0x8] sm:$0xff] %vm50, %v86
  $region25: #{transformer_forward.17} parent=0 // pred_fallthru
    _
  // Predicated region
  $region26: #{transformer_forward.17} parent=0 // pred_check
    _
  $region27: #{transformer_forward.17} parent=0 // pred_check_branch
    %90 = sbr.rel (0) target = $region29
  $region28: #{transformer_forward.17} parent=0 // pred_region
    _
  $region29: #{transformer_forward.17} parent=0 // pred_fallthru
    _
  // Predicated region
  $region30: #{transformer_forward.17} parent=0 // pred_check
    _
  $region31: #{transformer_forward.17} parent=0 // pred_check_branch
    %92 = sbr.rel (0) target = $region33
  $region32: #{transformer_forward.17} parent=0 // pred_region
    _
  $region33: #{transformer_forward.17} parent=0 // pred_fallthru
    _

// kernel: transformer_forward.18
$region0: #{transformer_forward.18}
  #allocation0 [shape = 'u32[]', space=smem, size = 0x4, offset = 0x4, fixed_abs, tag = 'smem constant byte address 0x4 - core index']
  #allocation1 [shape = 'u32[72,128]{1,0:T(1,128)}', space=vmem, size = 0x9000, scoped, tag = 'internal scratch']
  #allocation2 [shape = 'bf16[16,32]{1,0:T(8,128)(2,1)}', space=vmem, size = 0x1000, scoped, tag = 'scratch operand']
  %s0 = inlined_call_operand.vmem [shape: f32[16,32], index: 0, kind: input, shape index: {}]
  %s1 = inlined_call_operand.vmem [shape: f32[1,32], index: 1, kind: input, shape index: {}]
  %s2 = inlined_call_operand.vmem [shape: f32[1,32], index: 2, kind: input, shape index: {}]
  %s3 = inlined_call_operand.vmem [shape: bf16[32,128], index: 3, kind: input, shape index: {}]
  %s4 = inlined_call_operand.vmem [shape: f32[1,128], index: 4, kind: input, shape index: {}]
  %s5 = inlined_call_operand.vmem [shape: bf16[16,128], index: 5, kind: output, shape index: {}]
  %s6 = sld [smem:[#allocation0]]
  $region34: #{transformer_forward.18} parent=0
    _
  %s8 = ssub.s32 1, %s6
  %s9 = scalar_select 0, %s8, %s6
  // Predicated region
  $region2: #{transformer_forward.18} parent=0 // pred_check
    _
  $region3: #{transformer_forward.18} parent=0 // pred_check_branch
    %11 = sbr.rel (0) target = $region5
  $region4: #{transformer_forward.18} parent=0 // pred_region
    _
  $region5: #{transformer_forward.18} parent=0 // pred_fallthru
    _
  // Predicated region
  $region6: #{transformer_forward.18} parent=0 // pred_check
    _
  $region7: #{transformer_forward.18} parent=0 // pred_check_branch
    %13 = sbr.rel (0) target = $region9
  $region8: #{transformer_forward.18} parent=0 // pred_region
    _
  $region9: #{transformer_forward.18} parent=0 // pred_fallthru
    _
  // Predicated region
  $region10: #{transformer_forward.18} parent=0 // pred_check
    _
  $region11: #{transformer_forward.18} parent=0 // pred_check_branch
    %15 = sbr.rel (0) target = $region13
  $region12: #{transformer_forward.18} parent=0 // pred_region
    _
  $region13: #{transformer_forward.18} parent=0 // pred_fallthru
    _
  // Predicated region
  $region14: #{transformer_forward.18} parent=0 // pred_check
    _
  $region15: #{transformer_forward.18} parent=0 // pred_check_branch
    %17 = sbr.rel (0) target = $region17
  $region16: #{transformer_forward.18} parent=0 // pred_region
    _
  $region17: #{transformer_forward.18} parent=0 // pred_fallthru
    _
  // Predicated region
  $region18: #{transformer_forward.18} parent=0 // pred_check
    _
  $region19: #{transformer_forward.18} parent=0 // pred_check_branch
    %19 = sbr.rel (0) target = $region21
  $region20: #{transformer_forward.18} parent=0 // pred_region
    _
  $region21: #{transformer_forward.18} parent=0 // pred_fallthru
    _
  %p21 = scmp.eq.s32.totalorder 0, 0
  // Predicated region
  $region22: #{transformer_forward.18} parent=0 // pred_check
    %p22 = pneg %p21
  $region23: #{transformer_forward.18} parent=0 // pred_check_branch
    %24 = sbr.rel (%p22) target = $region25
  $region24: #{transformer_forward.18} parent=0 // pred_region
    %v25 = vld [vmem:[%s0] sm:$0xff]
    %v26 = vld [vmem:[%s0 + $0x8] sm:$0xff]
    %vm27 = vcmask 261120
    %v28 = vsel %vm27, %v25, 0.0
    %29 = vadd.xlane.f32.xlu0 %v28
    %v30 = vpop.xlane.xlu0 %29
    %v31 = vsel %vm27, %v26, 0.0
    %32 = vadd.xlane.f32.xlu0 %v31
    %v33 = vpop.xlane.xlu0 %32
    %v34 = vrcp.pop 32.0
    %v35 = vmul.f32 32.0, %v34
    %v36 = vsub.f32 1.0, %v35
    %v37 = vmul.f32 %v34, %v36
    %v38 = vadd.f32 %v34, %v37
    %vm39 = vweird.f32 %v34
    %v40 = vsel %vm39, %v34, %v38
    %v41 = vmul.f32 %v30, %v40
    %v42 = vmul.f32 %v33, %v40
    %v43 = vsub.f32 %v25, %v41
    %v44 = vsub.f32 %v26, %v42
    %v45 = vmul.f32 %v43, %v43
    %v46 = vmul.f32 %v44, %v44
    %v47 = vsel %vm27, %v45, 0.0
    %48 = vadd.xlane.f32.xlu0 %v47
    %v49 = vpop.xlane.xlu0 %48
    %v50 = vsel %vm27, %v46, 0.0
    %51 = vadd.xlane.f32.xlu0 %v50
    %v52 = vpop.xlane.xlu0 %51
    %v53 = vmul.f32 %v49, %v40
    %v54 = vmul.f32 %v52, %v40
    %v55 = vadd.f32 %v53, 1e-05
    %v56 = vadd.f32 %v54, 1e-05
    %v57 = vrsqrt.pop %v55
    %v58 = vmul.f32 %v57, %v55
    %v59 = vmul.f32 %v58, %v57
    %v60 = vmul.f32 0.5, %v59
    %v61 = vsub.f32 1.5, %v60
    %v62 = vmul.f32 %v57, %v61
    %vm63 = vweird.f32 %v55
    %vm64 = vweird.f32 %v57
    %vm65 = vmor %vm63, %vm64
    %v66 = vsel %vm65, %v57, %v62
    %v67 = vrsqrt.pop %v56
    %v68 = vmul.f32 %v67, %v56
    %v69 = vmul.f32 %v68, %v67
    %v70 = vmul.f32 0.5, %v69
    %v71 = vsub.f32 1.5, %v70
    %v72 = vmul.f32 %v67, %v71
    %vm73 = vweird.f32 %v56
    %vm74 = vweird.f32 %v67
    %vm75 = vmor %vm73, %vm74
    %v76 = vsel %vm75, %v67, %v72
    %v77 = vmul.f32 %v43, %v66
    %v78 = vmul.f32 %v44, %v76
    %v79 = vld [vmem:[%s1] sm:$0x1]
    %v81 = vperm.slane %v79, 0
    %v83 = vmul.f32 %v77, %v81
    %v84 = vmul.f32 %v78, %v81
    %v85 = vld [vmem:[%s2] sm:$0x1]
    %v87 = vperm.slane %v85, 0
    %v89 = vadd.f32 %v83, %v87
    %v90 = vadd.f32 %v84, %v87
    %v91 = vpack.c.bf16 %v89, %v89
    %v92 = vpack.c.bf16 %v90, %v90
    %vm93 = vcmask 257024
    %94 = vst.msk [vmem:[#allocation2] sm:$0xf] %vm93, %v91
    %95 = vst.msk [vmem:[#allocation2 + $0x4] sm:$0xf] %vm93, %v92
  $region25: #{transformer_forward.18} parent=0 // pred_fallthru
    _
  %v96 = vld [vmem:[#allocation2] sm:$0xf]
  %v97 = vld [vmem:[#allocation2 + $0x4] sm:$0xf]
  %v98 = vld [vmem:[%s3] sm:$0xf]
  %v99 = vld [vmem:[%s3 + $0x4] sm:$0xf]
  %v100 = vld [vmem:[%s3 + $0x8] sm:$0xf]
  %v101 = vld [vmem:[%s3 + $0xc] sm:$0xf]
  %v102 = vld [vmem:[%s4] sm:$0x1]
  %v104 = vperm.slane %v102, 0
  %v108 = vunpack.c.l.b16 %v96
  %v109 = vunpack.c.l.b16 %v97
  %v110 = vpack.c.b16 %v109, %v108
  %v115 = vunpack.c.l.b16 %v98
  %v116 = vunpack.c.l.b16 %v99
  %v117 = vunpack.c.l.b16 %v100
  %v118 = vunpack.c.l.b16 %v101
  %v119 = vpack.c.b16 %v116, %v115
  %v120 = vpack.c.b16 %v118, %v117
  %vm123 = vcmask 261120
  %v125 = vsel %vm123, %v110, 0
  %127 = vmatpush.bf16.msra.mxu0 0
  %128 = vmatpush.bf16.msra.mxu0 0
  %129 = vmatpush.bf16.msra.mxu0 0
  %130 = vmatpush.bf16.msra.mxu0 0
  %131 = vmatpush.bf16.msra.mxu0 0
  %132 = vmatpush.bf16.msra.mxu0 0
  %133 = vmatpush.bf16.msra.mxu0 %v120
  %134 = vmatpush.bf16.msra.mxu0 %v119
  %135 = vmatmul.bf16.gmra.mxu0 %v125
  %v136 = vpop.f32.mrf.mxu0
  %v137 = vadd.f32 %v104, %v136
  %v138 = vpop.f32.mrf.mxu0
  %v139 = vadd.f32 %v104, %v138
  %140 = vdwg.mxu0
  %v141 = vmul.f32 %v137, 1.702
  %v142 = vmul.f32 %v139, 1.702
  %v143 = vxor.u32 %v141, 2147483648
  %v144 = vxor.u32 %v142, 2147483648
  %v145 = vmul.f32 %v143, 1.442695
  %v146 = vpow.pop %v145
  %v147 = vmul.f32 %v144, 1.442695
  %v148 = vpow.pop %v147
  %v149 = vadd.f32 %v146, 1.0
  %v150 = vadd.f32 %v148, 1.0
  %v151 = vrcp.pop %v149
  %v152 = vmul.f32 %v149, %v151
  %v153 = vsub.f32 1.0, %v152
  %v154 = vmul.f32 %v151, %v153
  %v155 = vadd.f32 %v151, %v154
  %vm156 = vweird.f32 %v149
  %vm157 = vweird.f32 %v151
  %vm158 = vmor %vm156, %vm157
  %v159 = vsel %vm158, %v151, %v155
  %v160 = vand.u32 2147483647, %v149
  %vm161 = vcmp.eq.f32.partialorder %v160, 8.507059e+37
  %v162 = vand.u32 %v149, 2147483648
  %v163 = vor.u32 1.1754944e-38, %v162
  %v164 = vsel %vm161, %v163, %v159
  %v165 = vmul.f32 1.0, %v164
  %v166 = vrcp.pop %v150
  %v167 = vmul.f32 %v150, %v166
  %v168 = vsub.f32 1.0, %v167
  %v169 = vmul.f32 %v166, %v168
  %v170 = vadd.f32 %v166, %v169
  %vm171 = vweird.f32 %v150
  %vm172 = vweird.f32 %v166
  %vm173 = vmor %vm171, %vm172
  %v174 = vsel %vm173, %v166, %v170
  %v175 = vand.u32 2147483647, %v150
  %vm176 = vcmp.eq.f32.partialorder %v175, 8.507059e+37
  %v177 = vand.u32 %v150, 2147483648
  %v178 = vor.u32 1.1754944e-38, %v177
  %v179 = vsel %vm176, %v178, %v174
  %v180 = vmul.f32 1.0, %v179
  %v181 = vmul.f32 %v137, %v165
  %v182 = vmul.f32 %v139, %v180
  %v183 = vpack.c.bf16 %v181, %v181
  %v184 = vpack.c.bf16 %v182, %v182
  %185 = vst [vmem:[%s5] sm:$0xf] %v183
  %186 = vst [vmem:[%s5 + $0x4] sm:$0xf] %v184
  // Predicated region
  $region26: #{transformer_forward.18} parent=0 // pred_check
    _
  $region27: #{transformer_forward.18} parent=0 // pred_check_branch
    %188 = sbr.rel (0) target = $region29
  $region28: #{transformer_forward.18} parent=0 // pred_region
    _
  $region29: #{transformer_forward.18} parent=0 // pred_fallthru
    _
  // Predicated region
  $region30: #{transformer_forward.18} parent=0 // pred_check
    _
  $region31: #{transformer_forward.18} parent=0 // pred_check_branch
    %190 = sbr.rel (0) target = $region33
  $region32: #{transformer_forward.18} parent=0 // pred_region
    _
  $region33: #{transformer_forward.18} parent=0 // pred_fallthru
    _

// kernel: transformer_forward.14
$region0: #{transformer_forward.14}
  #allocation0 [shape = 'u32[]', space=smem, size = 0x4, offset = 0x4, fixed_abs, tag = 'smem constant byte address 0x4 - core index']
  #allocation1 [shape = 'u32[72,128]{1,0:T(1,128)}', space=vmem, size = 0x9000, scoped, tag = 'internal scratch']
  #allocation2 [shape = 'f32[16,32]{1,0:T(8,128)}', space=vmem, size = 0x2000, scoped, tag = 'scratch operand']
  %s0 = inlined_call_operand.vmem [shape: bf16[16,128], index: 0, kind: input, shape index: {}]
  %s1 = inlined_call_operand.vmem [shape: bf16[128,32], index: 1, kind: input, shape index: {}]
  %s2 = inlined_call_operand.vmem [shape: f32[1,32], index: 2, kind: input, shape index: {}]
  %s3 = inlined_call_operand.vmem [shape: f32[16,32], index: 3, kind: input, shape index: {}]
  %s4 = inlined_call_operand.vmem [shape: f32[16,32], index: 4, kind: output, shape index: {}]
  %s5 = sld [smem:[#allocation0]]
  $region34: #{transformer_forward.14} parent=0
    _
  %s7 = ssub.s32 1, %s5
  %s8 = scalar_select 0, %s7, %s5
  // Predicated region
  $region2: #{transformer_forward.14} parent=0 // pred_check
    _
  $region3: #{transformer_forward.14} parent=0 // pred_check_branch
    %10 = sbr.rel (0) target = $region5
  $region4: #{transformer_forward.14} parent=0 // pred_region
    _
  $region5: #{transformer_forward.14} parent=0 // pred_fallthru
    _
  // Predicated region
  $region6: #{transformer_forward.14} parent=0 // pred_check
    _
  $region7: #{transformer_forward.14} parent=0 // pred_check_branch
    %12 = sbr.rel (0) target = $region9
  $region8: #{transformer_forward.14} parent=0 // pred_region
    _
  $region9: #{transformer_forward.14} parent=0 // pred_fallthru
    _
  // Predicated region
  $region10: #{transformer_forward.14} parent=0 // pred_check
    _
  $region11: #{transformer_forward.14} parent=0 // pred_check_branch
    %14 = sbr.rel (0) target = $region13
  $region12: #{transformer_forward.14} parent=0 // pred_region
    _
  $region13: #{transformer_forward.14} parent=0 // pred_fallthru
    _
  // Predicated region
  $region14: #{transformer_forward.14} parent=0 // pred_check
    _
  $region15: #{transformer_forward.14} parent=0 // pred_check_branch
    %16 = sbr.rel (0) target = $region17
  $region16: #{transformer_forward.14} parent=0 // pred_region
    _
  $region17: #{transformer_forward.14} parent=0 // pred_fallthru
    _
  %p17 = scmp.eq.s32.totalorder 0, 0
  // Predicated region
  $region18: #{transformer_forward.14} parent=0 // pred_check
    %p18 = pneg %p17
  $region19: #{transformer_forward.14} parent=0 // pred_check_branch
    %20 = sbr.rel (%p18) target = $region21
  $region20: #{transformer_forward.14} parent=0 // pred_region
    %vm21 = vcmask 261120
    %22 = vst.msk [vmem:[#allocation2] sm:$0xff] %vm21, 0.0
    %23 = vst.msk [vmem:[#allocation2 + $0x8] sm:$0xff] %vm21, 0.0
  $region21: #{transformer_forward.14} parent=0 // pred_fallthru
    _
  %v24 = vld [vmem:[#allocation2] sm:$0xff]
  %v25 = vld [vmem:[#allocation2 + $0x8] sm:$0xff]
  %v26 = vld [vmem:[%s0] sm:$0xf]
  %v27 = vld [vmem:[%s0 + $0x4] sm:$0xf]
  %v28 = vld [vmem:[%s1] sm:$0xf]
  %v29 = vld [vmem:[%s1 + $0x4] sm:$0xf]
  %v30 = vld [vmem:[%s1 + $0x8] sm:$0xf]
  %v31 = vld [vmem:[%s1 + $0xc] sm:$0xf]
  %v32 = vld [vmem:[%s1 + $0x10] sm:$0xf]
  %v33 = vld [vmem:[%s1 + $0x14] sm:$0xf]
  %v34 = vld [vmem:[%s1 + $0x18] sm:$0xf]
  %v35 = vld [vmem:[%s1 + $0x1c] sm:$0xf]
  %v36 = vld [vmem:[%s1 + $0x20] sm:$0xf]
  %v37 = vld [vmem:[%s1 + $0x24] sm:$0xf]
  %v38 = vld [vmem:[%s1 + $0x28] sm:$0xf]
  %v39 = vld [vmem:[%s1 + $0x2c] sm:$0xf]
  %v40 = vld [vmem:[%s1 + $0x30] sm:$0xf]
  %v41 = vld [vmem:[%s1 + $0x34] sm:$0xf]
  %v42 = vld [vmem:[%s1 + $0x38] sm:$0xf]
  %v43 = vld [vmem:[%s1 + $0x3c] sm:$0xf]
  %v46 = vunpack.c.l.b16 %v26
  %v47 = vunpack.c.l.b16 %v27
  %v48 = vpack.c.b16 %v47, %v46
  %v66 = vunpack.c.l.b16 %v28
  %v67 = vunpack.c.l.b16 %v29
  %v68 = vunpack.c.l.b16 %v30
  %v69 = vunpack.c.l.b16 %v31
  %v70 = vunpack.c.l.b16 %v32
  %v71 = vunpack.c.l.b16 %v33
  %v72 = vunpack.c.l.b16 %v34
  %v73 = vunpack.c.l.b16 %v35
  %v74 = vunpack.c.l.b16 %v36
  %v75 = vunpack.c.l.b16 %v37
  %v76 = vunpack.c.l.b16 %v38
  %v77 = vunpack.c.l.b16 %v39
  %v78 = vunpack.c.l.b16 %v40
  %v79 = vunpack.c.l.b16 %v41
  %v80 = vunpack.c.l.b16 %v42
  %v81 = vunpack.c.l.b16 %v43
  %v82 = vpack.c.b16 %v67, %v66
  %v83 = vpack.c.b16 %v69, %v68
  %v84 = vpack.c.b16 %v71, %v70
  %v85 = vpack.c.b16 %v73, %v72
  %v86 = vpack.c.b16 %v75, %v74
  %v87 = vpack.c.b16 %v77, %v76
  %v88 = vpack.c.b16 %v79, %v78
  %v89 = vpack.c.b16 %v81, %v80
  %98 = vmatpush.bf16.msra.mxu0 %v89
  %99 = vmatpush.bf16.msra.mxu0 %v88
  %100 = vmatpush.bf16.msra.mxu0 %v87
  %101 = vmatpush.bf16.msra.mxu0 %v86
  %102 = vmatpush.bf16.msra.mxu0 %v85
  %103 = vmatpush.bf16.msra.mxu0 %v84
  %104 = vmatpush.bf16.msra.mxu0 %v83
  %105 = vmatpush.bf16.msra.mxu0 %v82
  %106 = vmatmul.bf16.gmra.mxu0 %v48
  %v107 = vpop.f32.mrf.mxu0
  %v108 = vadd.f32 0.0, %v107
  %v109 = vpop.f32.mrf.mxu0
  %v110 = vadd.f32 0.0, %v109
  %111 = vdwg.mxu0
  %v112 = vadd.f32 %v24, %v108
  %v113 = vadd.f32 %v25, %v110
  %vm114 = vcmask 261120
  %115 = vst.msk [vmem:[#allocation2] sm:$0xff] %vm114, %v112
  %116 = vst.msk [vmem:[#allocation2 + $0x8] sm:$0xff] %vm114, %v113
  // Predicated region
  $region22: #{transformer_forward.14} parent=0 // pred_check
    %p117 = pneg %p17
  $region23: #{transformer_forward.14} parent=0 // pred_check_branch
    %119 = sbr.rel (%p117) target = $region25
  $region24: #{transformer_forward.14} parent=0 // pred_region
    %v120 = vld [vmem:[#allocation2] sm:$0xff]
    %v121 = vld [vmem:[#allocation2 + $0x8] sm:$0xff]
    %v122 = vld [vmem:[%s2] sm:$0x1]
    %v124 = vperm.slane %v122, 0
    %v126 = vadd.f32 %v120, %v124
    %v127 = vadd.f32 %v121, %v124
    %v128 = vld [vmem:[%s3] sm:$0xff]
    %v129 = vld [vmem:[%s3 + $0x8] sm:$0xff]
    %v130 = vadd.f32 %v126, %v128
    %v131 = vadd.f32 %v127, %v129
    %132 = vst.msk [vmem:[%s4] sm:$0xff] %vm114, %v130
    %133 = vst.msk [vmem:[%s4 + $0x8] sm:$0xff] %vm114, %v131
  $region25: #{transformer_forward.14} parent=0 // pred_fallthru
    _
  // Predicated region
  $region26: #{transformer_forward.14} parent=0 // pred_check
    _
  $region27: #{transformer_forward.14} parent=0 // pred_check_branch
    %135 = sbr.rel (0) target = $region29
  $region28: #{transformer_forward.14} parent=0 // pred_region
    _
  $region29: #{transformer_forward.14} parent=0 // pred_fallthru
    _
  // Predicated region
  $region30: #{transformer_forward.14} parent=0 // pred_check
    _
  $region31: #{transformer_forward.14} parent=0 // pred_check_branch
    %137 = sbr.rel (0) target = $region33
  $region32: #{transformer_forward.14} parent=0 // pred_region
    _
  $region33: #{transformer_forward.14} parent=0 // pred_fallthru
    _

</llo_original>
